<compile_context>
chip_gen: v7x
topology: tpu7x:2x2x1
jax: 0.10.0
libtpu: 0.0.40
codegen_flags: <defaults>
</compile_context>

<pallas_src>
import functools

import jax
import jax.numpy as jnp
from jax.experimental import pallas as pl
from jax.experimental.pallas import tpu as pltpu


def _round_up(n, m):
    return ((n + m - 1) // m) * m


# ----------------------------------------------------------------------------- kernel


def gru_kernel(x_ref,                                   # (1, TB, Ip)  current timestep
               w0_ref, wn0_ref, b0_ref, bn0_ref,        # layer 0 fused weights/biases
               w1_ref, wn1_ref, b1_ref, bn1_ref,        # layer 1 fused weights/biases
               out_ref,                                 # (TB, Hp) log-probs (padded)
               h0_scr, h1_scr,                          # (TB, Hp) hidden-state scratch
               *, hp, hidden):
    t = pl.program_id(1)

    @pl.when(t == 0)
    def _init():
        # PyTorch default h_0 = zeros for both layers.
        h0_scr[...] = jnp.zeros_like(h0_scr)
        h1_scr[...] = jnp.zeros_like(h1_scr)

    def cell(inp, h_prev, w_cat, w_hn, b_cat, b_hn):
        # Fused matmul: [x, h] @ [W_ih ; W_hh(r,z only)]  -> r/z pre-activations
        # plus gi_n; separate small matmul for gh_n (needed inside r * gh_n).
        xh = jnp.concatenate([inp, h_prev], axis=1)                         # (TB, Kp)
        g = jnp.dot(xh, w_cat, preferred_element_type=jnp.float32) + b_cat  # (TB, 3Hp)
        rz = jax.nn.sigmoid(g[:, : 2 * hp])          # one contiguous EUP stream
        r = rz[:, :hp]
        z = rz[:, hp:]
        gh_n = jnp.dot(h_prev, w_hn, preferred_element_type=jnp.float32) + b_hn
        n = jnp.tanh(g[:, 2 * hp:] + r * gh_n)
        return (1.0 - z) * n + z * h_prev

    x_t = x_ref[0]                                                          # (TB, Ip)
    h0_new = cell(x_t, h0_scr[...], w0_ref[...], wn0_ref[...], b0_ref[...], bn0_ref[...])
    h1_new = cell(h0_new, h1_scr[...], w1_ref[...], wn1_ref[...], b1_ref[...], bn1_ref[...])
    h0_scr[...] = h0_new
    h1_scr[...] = h1_new

    @pl.when(t == pl.num_programs(1) - 1)
    def _final():
        # out = outs[:, -1, :]; then LogSoftmax(dim=1) over the REAL hidden lanes.
        # NOTE: the reference constructs nn.Linear but never applies it, so the
        # classifier acts directly on the (B, H) hidden state.
        lane = jax.lax.broadcasted_iota(jnp.int32, h1_new.shape, 1)
        hv = jnp.where(lane < hidden, h1_new, -jnp.inf)
        m = jnp.max(hv, axis=1, keepdims=True)
        shifted = hv - m
        lse = jnp.log(jnp.sum(jnp.exp(shifted), axis=1, keepdims=True))
        out_ref[...] = shifted - lse


# ----------------------------------------------------------------------------- wrapper


def _prep_layer(w_ih, w_hh, b_ih, b_hh, in_size, H, Kp_in, Hp):
    """Build fused, lane-padded weights for one GRU layer.

    Gate order along 3H is PyTorch's [r | z | n].
      w_cat : (Kp_in + Hp, 3*Hp)  rows [0:in_size]   = W_ih^T (all gates)
                                  rows [Kp_in:Kp_in+H] = W_hh^T (r, z gates only)
      w_hn  : (Hp, Hp)            W_hh^T n-gate block
      b_cat : (1, 3*Hp)           [b_ih_r + b_hh_r | b_ih_z + b_hh_z | b_ih_n]
      b_hn  : (1, Hp)             b_hh_n
    """
    wih_t = w_ih.T.astype(jnp.float32)   # (in_size, 3H)
    whh_t = w_hh.T.astype(jnp.float32)   # (H, 3H)

    w_cat = jnp.zeros((Kp_in + Hp, 3 * Hp), jnp.float32)
    for g in range(3):
        w_cat = w_cat.at[:in_size, g * Hp:g * Hp + H].set(wih_t[:, g * H:(g + 1) * H])
    for g in range(2):  # r, z only
        w_cat = w_cat.at[Kp_in:Kp_in + H, g * Hp:g * Hp + H].set(whh_t[:, g * H:(g + 1) * H])

    w_hn = jnp.zeros((Hp, Hp), jnp.float32).at[:H, :H].set(whh_t[:, 2 * H:3 * H])

    b_cat = jnp.zeros((1, 3 * Hp), jnp.float32)
    b_cat = b_cat.at[0, 0:H].set(b_ih[0:H] + b_hh[0:H])
    b_cat = b_cat.at[0, Hp:Hp + H].set(b_ih[H:2 * H] + b_hh[H:2 * H])
    b_cat = b_cat.at[0, 2 * Hp:2 * Hp + H].set(b_ih[2 * H:3 * H])
    b_hn = jnp.zeros((1, Hp), jnp.float32).at[0, :H].set(b_hh[2 * H:3 * H])

    return w_cat, w_hn, b_cat, b_hn


def init_gru_params(key, input_size, hidden_size):
    """Deterministic init mirroring PyTorch's U(-1/sqrt(H), 1/sqrt(H))."""
    H = hidden_size
    k = 1.0 / jnp.sqrt(jnp.float32(H))
    names_shapes = [
        ("w_ih_l0", (3 * H, input_size)),
        ("w_hh_l0", (3 * H, H)),
        ("b_ih_l0", (3 * H,)),
        ("b_hh_l0", (3 * H,)),
        ("w_ih_l1", (3 * H, H)),
        ("w_hh_l1", (3 * H, H)),
        ("b_ih_l1", (3 * H,)),
        ("b_hh_l1", (3 * H,)),
    ]
    params = {}
    keys = jax.random.split(key, len(names_shapes))
    for (name, shape), kk in zip(names_shapes, keys):
        params[name] = jax.random.uniform(kk, shape, jnp.float32, -k, k)
    return params


def basic_gru_forward(x, params, hidden_size):
    """x: (B, T, I) float32 -> (B, H) float32 log-probabilities."""
    if x.ndim == 2:
        x = x[None, ...]   # mirror input_.unsqueeze(0)
    B, T, I = x.shape
    H = hidden_size

    TB = 8                           # batch tile (one sublane tile)
    Bp = _round_up(B, TB)
    Ip = _round_up(I, 128)
    Hp = _round_up(H, 128)
    Bb = Bp // TB

    # Time-major, zero-padded x: (T, Bp, Ip). Padded lanes/rows stay zero.
    x_p = jnp.zeros((T, Bp, Ip), jnp.float32)
    x_p = x_p.at[:, :B, :I].set(jnp.transpose(x.astype(jnp.float32), (1, 0, 2)))

    w0_cat, w0_hn, b0_cat, b0_hn = _prep_layer(
        params["w_ih_l0"], params["w_hh_l0"], params["b_ih_l0"], params["b_hh_l0"],
        in_size=I, H=H, Kp_in=Ip, Hp=Hp)
    w1_cat, w1_hn, b1_cat, b1_hn = _prep_layer(
        params["w_ih_l1"], params["w_hh_l1"], params["b_ih_l1"], params["b_hh_l1"],
        in_size=H, H=H, Kp_in=Hp, Hp=Hp)

    kernel = functools.partial(gru_kernel, hp=Hp, hidden=H)

    def resident(shape):
        # Full-array block, constant index_map -> stays in VMEM across the grid.
        return pl.BlockSpec(shape, lambda b, t: tuple(0 for _ in shape))

    grid_spec = pltpu.PrefetchScalarGridSpec(
        num_scalar_prefetch=0,
        grid=(Bb, T),
        in_specs=[
            pl.BlockSpec((1, TB, Ip), lambda b, t: (t, b, 0)),   # x: one timestep
            resident(w0_cat.shape), resident(w0_hn.shape),
            resident(b0_cat.shape), resident(b0_hn.shape),
            resident(w1_cat.shape), resident(w1_hn.shape),
            resident(b1_cat.shape), resident(b1_hn.shape),
        ],
        out_specs=pl.BlockSpec((TB, Hp), lambda b, t: (b, 0)),
        scratch_shapes=[
            pltpu.VMEM((TB, Hp), jnp.float32),   # h state, layer 0
            pltpu.VMEM((TB, Hp), jnp.float32),   # h state, layer 1
        ],
    )

    out_p = pl.pallas_call(
        kernel,
        out_shape=jax.ShapeDtypeStruct((Bp, Hp), jnp.float32),
        grid_spec=grid_spec,
        compiler_params=pltpu.CompilerParams(
            dimension_semantics=("parallel", "arbitrary"),
            vmem_limit_bytes=32 * 1024 * 1024,
        ),
    )(x_p, w0_cat, w0_hn, b0_cat, b0_hn, w1_cat, w1_hn, b1_cat, b1_hn)

    return out_p[:B, :H]


# ----------------------------------------------------------------------------- reference


def gru_reference(x, params, H):
    """Pure-JAX replica of the PyTorch forward, for correctness checking."""
    if x.ndim == 2:
        x = x[None, ...]
    B, T, I = x.shape
    hi = jax.lax.Precision.HIGHEST

    def cell(x_t, h, w_ih, w_hh, b_ih, b_hh):
        gi = jnp.dot(x_t, w_ih.T, precision=hi) + b_ih
        gh = jnp.dot(h, w_hh.T, precision=hi) + b_hh
        r = jax.nn.sigmoid(gi[:, :H] + gh[:, :H])
        z = jax.nn.sigmoid(gi[:, H:2 * H] + gh[:, H:2 * H])
        n = jnp.tanh(gi[:, 2 * H:] + r * gh[:, 2 * H:])
        return (1.0 - z) * n + z * h

    h0 = jnp.zeros((B, H), jnp.float32)
    h1 = jnp.zeros((B, H), jnp.float32)
    for t in range(T):
        h0 = cell(x[:, t, :], h0, params["w_ih_l0"], params["w_hh_l0"],
                  params["b_ih_l0"], params["b_hh_l0"])
        h1 = cell(h0, h1, params["w_ih_l1"], params["w_hh_l1"],
                  params["b_ih_l1"], params["b_hh_l1"])
    return jax.nn.log_softmax(h1, axis=1)


if __name__ == "__main__":
    B, T, I, H = 2, 8, 16, 32

    root = jax.random.PRNGKey(0)
    k_x, k_p = jax.random.split(root)
    x = jax.random.normal(k_x, (B, T, I), jnp.float32)
    params = init_gru_params(k_p, input_size=I, hidden_size=H)

    out = basic_gru_forward(x, params, hidden_size=H)
    out = jax.block_until_ready(out)

    assert out.shape == (B, H)
    # log-softmax rows must (exp-)sum to ~1
    assert jnp.allclose(jnp.sum(jnp.exp(out), axis=1), 1.0, atol=1e-4)
    # match the pure-JAX reference GRU
    ref = gru_reference(x, params, H)
    assert jnp.allclose(out, ref, atol=5e-3, rtol=5e-3)

    print("KERNEL_OK")
</pallas_src>

<mosaic_0001>
module attributes {stable_mosaic.version = 11 : i64} {
  func.func @gru_kernel(%arg0: i32, %arg1: i32, %arg2: memref<1x8x128xf32, #tpu.memory_space<vmem>>, %arg3: memref<256x384xf32, #tpu.memory_space<vmem>>, %arg4: memref<128x128xf32, #tpu.memory_space<vmem>>, %arg5: memref<1x384xf32, #tpu.memory_space<vmem>>, %arg6: memref<1x128xf32, #tpu.memory_space<vmem>>, %arg7: memref<256x384xf32, #tpu.memory_space<vmem>>, %arg8: memref<128x128xf32, #tpu.memory_space<vmem>>, %arg9: memref<1x384xf32, #tpu.memory_space<vmem>>, %arg10: memref<1x128xf32, #tpu.memory_space<vmem>>, %arg11: memref<8x128xf32, #tpu.memory_space<vmem>>, %arg12: memref<8x128xf32, #tpu.memory_space<vmem>>, %arg13: memref<8x128xf32, #tpu.memory_space<vmem>>) attributes {dimension_semantics = [#tpu.dimension_semantics<parallel>, #tpu.dimension_semantics<arbitrary>], iteration_bounds = array<i64: 1, 8>, scalar_prefetch = 0 : i64, scratch_operands = 2 : i64, tpu.core_type = #tpu.core_type<tc>, window_params = [{transform_indices = @transform_0, window_bounds = array<i64: 1, 8, 128>}, {pipeline_mode = #tpu.pipeline_mode<synchronous>, transform_indices = @transform_1, window_bounds = array<i64: 256, 384>}, {pipeline_mode = #tpu.pipeline_mode<synchronous>, transform_indices = @transform_2, window_bounds = array<i64: 128, 128>}, {pipeline_mode = #tpu.pipeline_mode<synchronous>, transform_indices = @transform_3, window_bounds = array<i64: 1, 384>}, {pipeline_mode = #tpu.pipeline_mode<synchronous>, transform_indices = @transform_4, window_bounds = array<i64: 1, 128>}, {pipeline_mode = #tpu.pipeline_mode<synchronous>, transform_indices = @transform_5, window_bounds = array<i64: 256, 384>}, {pipeline_mode = #tpu.pipeline_mode<synchronous>, transform_indices = @transform_6, window_bounds = array<i64: 128, 128>}, {pipeline_mode = #tpu.pipeline_mode<synchronous>, transform_indices = @transform_7, window_bounds = array<i64: 1, 384>}, {pipeline_mode = #tpu.pipeline_mode<synchronous>, transform_indices = @transform_8, window_bounds = array<i64: 1, 128>}, {transform_indices = @transform_9, window_bounds = array<i64: 8, 128>}]} {
    %c0_i32 = arith.constant 0 : i32
    %0 = arith.cmpi eq, %arg1, %c0_i32 : i32
    %1 = arith.extui %0 : i1 to i32
    %c0_i32_0 = arith.constant 0 : i32
    %2 = arith.cmpi ne, %1, %c0_i32_0 : i32
    scf.if %2 {
      %cst_35 = arith.constant 0.000000e+00 : f32
      %68 = vector.broadcast %cst_35 : f32 to vector<8x128xf32>
      %c0_36 = arith.constant 0 : index
      %c0_37 = arith.constant 0 : index
      %69 = vector.load %arg12[%c0_36, %c0_37] : memref<8x128xf32, #tpu.memory_space<vmem>>, vector<8x128xf32>
      tpu.vector_store %arg12[%c0_36, %c0_37], %68 {strides = array<i32>} : memref<8x128xf32, #tpu.memory_space<vmem>>, vector<8x128xf32>,
      %cst_38 = arith.constant 0.000000e+00 : f32
      %70 = vector.broadcast %cst_38 : f32 to vector<8x128xf32>
      %c0_39 = arith.constant 0 : index
      %c0_40 = arith.constant 0 : index
      %71 = vector.load %arg13[%c0_39, %c0_40] : memref<8x128xf32, #tpu.memory_space<vmem>>, vector<8x128xf32>
      tpu.vector_store %arg13[%c0_39, %c0_40], %70 {strides = array<i32>} : memref<8x128xf32, #tpu.memory_space<vmem>>, vector<8x128xf32>,
    } else {
    }
    %c0 = arith.constant 0 : index
    %c0_1 = arith.constant 0 : index
    %c0_2 = arith.constant 0 : index
    %3 = vector.load %arg2[%c0, %c0_1, %c0_2] : memref<1x8x128xf32, #tpu.memory_space<vmem>>, vector<1x8x128xf32>
    %4 = vector.shape_cast %3 : vector<1x8x128xf32> to vector<8x128xf32>
    %c0_3 = arith.constant 0 : index
    %c0_4 = arith.constant 0 : index
    %5 = vector.load %arg12[%c0_3, %c0_4] : memref<8x128xf32, #tpu.memory_space<vmem>>, vector<8x128xf32>
    %c0_5 = arith.constant 0 : index
    %c0_6 = arith.constant 0 : index
    %6 = vector.load %arg3[%c0_5, %c0_6] : memref<256x384xf32, #tpu.memory_space<vmem>>, vector<256x384xf32>
    %c0_7 = arith.constant 0 : index
    %c0_8 = arith.constant 0 : index
    %7 = vector.load %arg4[%c0_7, %c0_8] : memref<128x128xf32, #tpu.memory_space<vmem>>, vector<128x128xf32>
    %c0_9 = arith.constant 0 : index
    %c0_10 = arith.constant 0 : index
    %8 = vector.load %arg5[%c0_9, %c0_10] : memref<1x384xf32, #tpu.memory_space<vmem>>, vector<1x384xf32>
    %c0_11 = arith.constant 0 : index
    %c0_12 = arith.constant 0 : index
    %9 = vector.load %arg6[%c0_11, %c0_12] : memref<1x128xf32, #tpu.memory_space<vmem>>, vector<1x128xf32>
    %10 = tpu.concatenate %4, %5 in 1 : vector<8x128xf32>, vector<8x128xf32> -> vector<8x256xf32>
    %cst = arith.constant dense<0.000000e+00> : vector<8x384xf32>
    %11 = tpu.matmul %10, %6, %cst {dimension_numbers = #tpu.dot_dimension_numbers<[1], [0], [0], [1], [0, 0, 1, 1], [], []>} : vector<8x256xf32>, vector<256x384xf32>, vector<8x384xf32> -> vector<8x384xf32>
    %12 = vector.broadcast %8 : vector<1x384xf32> to vector<8x384xf32>
    %13 = arith.addf %11, %12 : vector<8x384xf32>
    %14 = vector.extract_strided_slice %13 {offsets = [0, 0], sizes = [8, 256], strides = [1, 1]} : vector<8x384xf32> to vector<8x256xf32>
    %15 = arith.negf %14 : vector<8x256xf32>
    %16 = math.exp %15 : vector<8x256xf32>
    %cst_13 = arith.constant 1.000000e+00 : f32
    %17 = vector.broadcast %cst_13 : f32 to vector<8x256xf32>
    %18 = arith.addf %17, %16 : vector<8x256xf32>
    %19 = arith.divf %17, %18 : vector<8x256xf32>
    %20 = vector.extract_strided_slice %19 {offsets = [0, 0], sizes = [8, 128], strides = [1, 1]} : vector<8x256xf32> to vector<8x128xf32>
    %21 = vector.extract_strided_slice %19 {offsets = [0, 128], sizes = [8, 128], strides = [1, 1]} : vector<8x256xf32> to vector<8x128xf32>
    %cst_14 = arith.constant dense<0.000000e+00> : vector<8x128xf32>
    %22 = tpu.matmul %5, %7, %cst_14 {dimension_numbers = #tpu.dot_dimension_numbers<[1], [0], [0], [1], [0, 0, 1, 1], [], []>} : vector<8x128xf32>, vector<128x128xf32>, vector<8x128xf32> -> vector<8x128xf32>
    %23 = vector.broadcast %9 : vector<1x128xf32> to vector<8x128xf32>
    %24 = arith.addf %22, %23 : vector<8x128xf32>
    %25 = vector.extract_strided_slice %13 {offsets = [0, 256], sizes = [8, 128], strides = [1, 1]} : vector<8x384xf32> to vector<8x128xf32>
    %26 = arith.mulf %20, %24 : vector<8x128xf32>
    %27 = arith.addf %25, %26 : vector<8x128xf32>
    %28 = math.tanh %27 : vector<8x128xf32>
    %cst_15 = arith.constant 1.000000e+00 : f32
    %29 = vector.broadcast %cst_15 : f32 to vector<8x128xf32>
    %30 = arith.subf %29, %21 : vector<8x128xf32>
    %31 = arith.mulf %30, %28 : vector<8x128xf32>
    %32 = arith.mulf %21, %5 : vector<8x128xf32>
    %33 = arith.addf %31, %32 : vector<8x128xf32>
    %c0_16 = arith.constant 0 : index
    %c0_17 = arith.constant 0 : index
    %34 = vector.load %arg13[%c0_16, %c0_17] : memref<8x128xf32, #tpu.memory_space<vmem>>, vector<8x128xf32>
    %c0_18 = arith.constant 0 : index
    %c0_19 = arith.constant 0 : index
    %35 = vector.load %arg7[%c0_18, %c0_19] : memref<256x384xf32, #tpu.memory_space<vmem>>, vector<256x384xf32>
    %c0_20 = arith.constant 0 : index
    %c0_21 = arith.constant 0 : index
    %36 = vector.load %arg8[%c0_20, %c0_21] : memref<128x128xf32, #tpu.memory_space<vmem>>, vector<128x128xf32>
    %c0_22 = arith.constant 0 : index
    %c0_23 = arith.constant 0 : index
    %37 = vector.load %arg9[%c0_22, %c0_23] : memref<1x384xf32, #tpu.memory_space<vmem>>, vector<1x384xf32>
    %c0_24 = arith.constant 0 : index
    %c0_25 = arith.constant 0 : index
    %38 = vector.load %arg10[%c0_24, %c0_25] : memref<1x128xf32, #tpu.memory_space<vmem>>, vector<1x128xf32>
    %39 = tpu.concatenate %33, %34 in 1 : vector<8x128xf32>, vector<8x128xf32> -> vector<8x256xf32>
    %cst_26 = arith.constant dense<0.000000e+00> : vector<8x384xf32>
    %40 = tpu.matmul %39, %35, %cst_26 {dimension_numbers = #tpu.dot_dimension_numbers<[1], [0], [0], [1], [0, 0, 1, 1], [], []>} : vector<8x256xf32>, vector<256x384xf32>, vector<8x384xf32> -> vector<8x384xf32>
    %41 = vector.broadcast %37 : vector<1x384xf32> to vector<8x384xf32>
    %42 = arith.addf %40, %41 : vector<8x384xf32>
    %43 = vector.extract_strided_slice %42 {offsets = [0, 0], sizes = [8, 256], strides = [1, 1]} : vector<8x384xf32> to vector<8x256xf32>
    %44 = arith.negf %43 : vector<8x256xf32>
    %45 = math.exp %44 : vector<8x256xf32>
    %cst_27 = arith.constant 1.000000e+00 : f32
    %46 = vector.broadcast %cst_27 : f32 to vector<8x256xf32>
    %47 = arith.addf %46, %45 : vector<8x256xf32>
    %48 = arith.divf %46, %47 : vector<8x256xf32>
    %49 = vector.extract_strided_slice %48 {offsets = [0, 0], sizes = [8, 128], strides = [1, 1]} : vector<8x256xf32> to vector<8x128xf32>
    %50 = vector.extract_strided_slice %48 {offsets = [0, 128], sizes = [8, 128], strides = [1, 1]} : vector<8x256xf32> to vector<8x128xf32>
    %cst_28 = arith.constant dense<0.000000e+00> : vector<8x128xf32>
    %51 = tpu.matmul %34, %36, %cst_28 {dimension_numbers = #tpu.dot_dimension_numbers<[1], [0], [0], [1], [0, 0, 1, 1], [], []>} : vector<8x128xf32>, vector<128x128xf32>, vector<8x128xf32> -> vector<8x128xf32>
    %52 = vector.broadcast %38 : vector<1x128xf32> to vector<8x128xf32>
    %53 = arith.addf %51, %52 : vector<8x128xf32>
    %54 = vector.extract_strided_slice %42 {offsets = [0, 256], sizes = [8, 128], strides = [1, 1]} : vector<8x384xf32> to vector<8x128xf32>
    %55 = arith.mulf %49, %53 : vector<8x128xf32>
    %56 = arith.addf %54, %55 : vector<8x128xf32>
    %57 = math.tanh %56 : vector<8x128xf32>
    %cst_29 = arith.constant 1.000000e+00 : f32
    %58 = vector.broadcast %cst_29 : f32 to vector<8x128xf32>
    %59 = arith.subf %58, %50 : vector<8x128xf32>
    %60 = arith.mulf %59, %57 : vector<8x128xf32>
    %61 = arith.mulf %50, %34 : vector<8x128xf32>
    %62 = arith.addf %60, %61 : vector<8x128xf32>
    %c0_30 = arith.constant 0 : index
    %c0_31 = arith.constant 0 : index
    %63 = vector.load %arg12[%c0_30, %c0_31] : memref<8x128xf32, #tpu.memory_space<vmem>>, vector<8x128xf32>
    tpu.vector_store %arg12[%c0_30, %c0_31], %33 {strides = array<i32>} : memref<8x128xf32, #tpu.memory_space<vmem>>, vector<8x128xf32>,
    %c0_32 = arith.constant 0 : index
    %c0_33 = arith.constant 0 : index
    %64 = vector.load %arg13[%c0_32, %c0_33] : memref<8x128xf32, #tpu.memory_space<vmem>>, vector<8x128xf32>
    tpu.vector_store %arg13[%c0_32, %c0_33], %62 {strides = array<i32>} : memref<8x128xf32, #tpu.memory_space<vmem>>, vector<8x128xf32>,
    %c7_i32 = arith.constant 7 : i32
    %65 = arith.cmpi eq, %arg1, %c7_i32 : i32
    %66 = arith.extui %65 : i1 to i32
    %c0_i32_34 = arith.constant 0 : i32
    %67 = arith.cmpi ne, %66, %c0_i32_34 : i32
    scf.if %67 {
      %68 = tpu.iota {dimensions = array<i32: 1>} : vector<8x128xi32>
      %c32_i32 = arith.constant 32 : i32
      %69 = vector.broadcast %c32_i32 : i32 to vector<8x128xi32>
      %70 = arith.cmpi slt, %68, %69 : vector<8x128xi32>
      %cst_35 = arith.constant 0xFF800000 : f32
      %71 = vector.broadcast %cst_35 : f32 to vector<8x128xf32>
      %72 = arith.select %70, %62, %71 : vector<8x128xi1>, vector<8x128xf32>
      %cst_36 = arith.constant dense<0xFF800000> : vector<8xf32>
      %73 = vector.multi_reduction <maximumf>, %72, %cst_36 [1] : vector<8x128xf32> to vector<8xf32>
      %74 = vector.shape_cast %73 : vector<8xf32> to vector<8x1xf32>
      %75 = vector.broadcast %74 : vector<8x1xf32> to vector<8x128xf32>
      %76 = arith.subf %72, %75 : vector<8x128xf32>
      %77 = math.exp %76 : vector<8x128xf32>
      %cst_37 = arith.constant dense<0.000000e+00> : vector<8xf32>
      %78 = vector.multi_reduction <add>, %77, %cst_37 [1] : vector<8x128xf32> to vector<8xf32>
      %79 = vector.shape_cast %78 : vector<8xf32> to vector<8x1xf32>
      %80 = math.log %79 : vector<8x1xf32>
      %81 = vector.broadcast %80 : vector<8x1xf32> to vector<8x128xf32>
      %82 = arith.subf %76, %81 : vector<8x128xf32>
      %c0_38 = arith.constant 0 : index
      %c0_39 = arith.constant 0 : index
      %83 = vector.load %arg11[%c0_38, %c0_39] : memref<8x128xf32, #tpu.memory_space<vmem>>, vector<8x128xf32>
      tpu.vector_store %arg11[%c0_38, %c0_39], %82 {strides = array<i32>} : memref<8x128xf32, #tpu.memory_space<vmem>>, vector<8x128xf32>,
    } else {
    }
    return
  }
  func.func @transform_0(%arg0: i32, %arg1: i32) -> (i32, i32, i32) {
    %c0_i32 = arith.constant 0 : i32
    %c0_i32_0 = arith.constant 0 : i32
    return %arg1, %arg0, %c0_i32 : i32, i32, i32
  }
  func.func @transform_1(%arg0: i32, %arg1: i32) -> (i32, i32) {
    %c0_i32 = arith.constant 0 : i32
    %c0_i32_0 = arith.constant 0 : i32
    %c0_i32_1 = arith.constant 0 : i32
    return %c0_i32, %c0_i32_0 : i32, i32
  }
  func.func @transform_2(%arg0: i32, %arg1: i32) -> (i32, i32) {
    %c0_i32 = arith.constant 0 : i32
    %c0_i32_0 = arith.constant 0 : i32
    %c0_i32_1 = arith.constant 0 : i32
    return %c0_i32, %c0_i32_0 : i32, i32
  }
  func.func @transform_3(%arg0: i32, %arg1: i32) -> (i32, i32) {
    %c0_i32 = arith.constant 0 : i32
    %c0_i32_0 = arith.constant 0 : i32
    %c0_i32_1 = arith.constant 0 : i32
    return %c0_i32, %c0_i32_0 : i32, i32
  }
  func.func @transform_4(%arg0: i32, %arg1: i32) -> (i32, i32) {
    %c0_i32 = arith.constant 0 : i32
    %c0_i32_0 = arith.constant 0 : i32
    %c0_i32_1 = arith.constant 0 : i32
    return %c0_i32, %c0_i32_0 : i32, i32
  }
  func.func @transform_5(%arg0: i32, %arg1: i32) -> (i32, i32) {
    %c0_i32 = arith.constant 0 : i32
    %c0_i32_0 = arith.constant 0 : i32
    %c0_i32_1 = arith.constant 0 : i32
    return %c0_i32, %c0_i32_0 : i32, i32
  }
  func.func @transform_6(%arg0: i32, %arg1: i32) -> (i32, i32) {
    %c0_i32 = arith.constant 0 : i32
    %c0_i32_0 = arith.constant 0 : i32
    %c0_i32_1 = arith.constant 0 : i32
    return %c0_i32, %c0_i32_0 : i32, i32
  }
  func.func @transform_7(%arg0: i32, %arg1: i32) -> (i32, i32) {
    %c0_i32 = arith.constant 0 : i32
    %c0_i32_0 = arith.constant 0 : i32
    %c0_i32_1 = arith.constant 0 : i32
    return %c0_i32, %c0_i32_0 : i32, i32
  }
  func.func @transform_8(%arg0: i32, %arg1: i32) -> (i32, i32) {
    %c0_i32 = arith.constant 0 : i32
    %c0_i32_0 = arith.constant 0 : i32
    %c0_i32_1 = arith.constant 0 : i32
    return %c0_i32, %c0_i32_0 : i32, i32
  }
  func.func @transform_9(%arg0: i32, %arg1: i32) -> (i32, i32) {
    %c0_i32 = arith.constant 0 : i32
    %c0_i32_0 = arith.constant 0 : i32
    return %arg0, %c0_i32 : i32, i32
  }
}

</mosaic_0001>

<llo_original>
// kernel: tpu_custom_call.1
$region0: #{tpu_custom_call.1}
  #allocation0 [shape = 'u32[]', space=smem, size = 0x4, offset = 0x4, fixed_abs, tag = 'smem constant byte address 0x4 - core index']
  #allocation1 [shape = 'u32[144,128]{1,0:T(1,128)}', space=vmem, size = 0x12000, scoped, tag = 'internal scratch']
  #allocation2 [shape = 'f32[8,128]{1,0:T(8,128)}', space=vmem, size = 0x1000, scoped, tag = 'scratch operand']
  #allocation3 [shape = 'f32[8,128]{1,0:T(8,128)}', space=vmem, size = 0x1000, scoped, tag = 'scratch operand']
  %s0 = inlined_call_operand.hbm [shape: f32[8,8,128], index: 0, kind: input, shape index: {}]
  %s1 = inlined_call_operand.hbm [shape: f32[256,384], index: 1, kind: input, shape index: {}]
  %s2 = inlined_call_operand.hbm [shape: f32[128,128], index: 2, kind: input, shape index: {}]
  %s3 = inlined_call_operand.vmem [shape: f32[1,384], index: 3, kind: input, shape index: {}]
  %s4 = inlined_call_operand.vmem [shape: f32[1,128], index: 4, kind: input, shape index: {}]
  %s5 = inlined_call_operand.hbm [shape: f32[256,384], index: 5, kind: input, shape index: {}]
  %s6 = inlined_call_operand.hbm [shape: f32[128,128], index: 6, kind: input, shape index: {}]
  %s7 = inlined_call_operand.vmem [shape: f32[1,384], index: 7, kind: input, shape index: {}]
  %s8 = inlined_call_operand.vmem [shape: f32[1,128], index: 8, kind: input, shape index: {}]
  %s9 = inlined_call_operand.hbm [shape: f32[8,128], index: 9, kind: output, shape index: {}]
  %s10 = sld [smem:[#allocation0]]
  $region97: #{tpu_custom_call.1} parent=0
    _
  %s12 = ssub.s32 1, %s10
  %s13 = scalar_select 0, %s12, %s10
  $region1: #{tpu_custom_call.1} parent=0
    #allocation4 [shape = 'u8[8192]{0}', space=vmem, size = 0x2000, scoped, tag = 'input window, operand 0']
    #allocation5 [shape = 's32[2]{0}', space=sflag, size = 0x8, scoped, tag = 'scoped memory for tpu_custom_call.1']
    #allocation6 [shape = 's32[2]{0}', space=sflag, size = 0x8, scoped, tag = 'scoped memory for tpu_custom_call.1']
    #allocation7 [shape = 'u8[393216]{0}', space=vmem, size = 0x60000, scoped, tag = 'input window, operand 1, single buffered']
    #allocation8 [shape = 's32[1]{0}', space=sflag, size = 0x4, scoped, tag = 'scoped memory for tpu_custom_call.1']
    #allocation9 [shape = 'u8[65536]{0}', space=vmem, size = 0x10000, scoped, tag = 'input window, operand 2, single buffered']
    #allocation10 [shape = 'u8[393216]{0}', space=vmem, size = 0x60000, scoped, tag = 'input window, operand 5, single buffered']
    #allocation11 [shape = 's32[1]{0}', space=sflag, size = 0x4, scoped, tag = 'scoped memory for tpu_custom_call.1']
    #allocation12 [shape = 'u8[65536]{0}', space=vmem, size = 0x10000, scoped, tag = 'input window, operand 6, single buffered']
    #allocation13 [shape = 'u8[4096]{0}', space=vmem, size = 0x1000, scoped, tag = 'output window, operand 0, single buffered']
    %14 = vsyncpa [#allocation5], 0
    %s15 = scalar_lea.sflag [#allocation5], 1
    %16 = vsyncpa %s15, 0
    %17 = vsyncpa [#allocation8], 0
    %18 = vsyncpa [#allocation11], 0
    %19 = vsyncpa [#allocation6], 0
    loop: start=0, step=1, limit=10
    $region2: #{tpu_custom_call.1} parent=1 // loop_pre_header
      _
    $region3: #{tpu_custom_call.1} parent=1 // loop_header
      %s21 = sphi 0, %s25
      %p22 = scmp.ge.s32.totalorder %s21, 10
      %s28 = sphi 0, %s40
      %s29 = sphi 0, %s36
      %s30 = sphi 0, %s28
      %s31 = sphi 0, %s29
      %s32 = sphi 0, %s30
      %s33 = sphi 0, %s31
      %s45 = sphi 0, %s47
      %s48 = sphi 0, %s45
      %s49 = sphi 0, %s48
      %s65 = sphi 0, %s49
      %s69 = sphi 0, %s69
      %s71 = sphi 0, %s69
      %s72 = sphi 0, %s71
      %s86 = sphi 0, %s72
      %s90 = sphi 0, %s90
      %s92 = sphi 0, %s90
      %s93 = sphi 0, %s92
      %s107 = sphi 0, %s93
      %s111 = sphi 0, %s111
      %s113 = sphi 0, %s111
      %s114 = sphi 0, %s113
      %s128 = sphi 0, %s114
      %s132 = sphi 0, %s132
      %s134 = sphi 0, %s132
      %s135 = sphi 0, %s134
      %s149 = sphi 0, %s135
      %s153 = sphi 0, %s153
      %s155 = sphi 0, %s153
      %s156 = sphi 0, %s155
      %s170 = sphi 0, %s156
      %s174 = sphi 0, %s174
      %s176 = sphi 0, %s174
      %s177 = sphi 0, %s176
      %s191 = sphi 0, %s177
      %s195 = sphi 0, %s195
      %s197 = sphi 0, %s195
      %s198 = sphi 0, %s197
      %s212 = sphi 0, %s198
      %s216 = sphi 0, %s216
      %s218 = sphi 0, %s216
      %s219 = sphi 0, %s218
      %s233 = sphi 0, %s219
      %s239 = sphi 0, %s241
      %s242 = sphi 0, %s239
      %s243 = sphi 0, %s242
      %s259 = sphi 0, %s243
    $region4: #{tpu_custom_call.1} parent=1 // loop_header_branch
      %24 = sbr.rel (%p22) target = $region8
    $region5: #{tpu_custom_call.1} parent=1 // loop_body
      %s26 = ssub.s32 %s21, 1
      %s27 = ssub.s32 %s21, 2
      %s34 = sadd.s32 1, %s29
      %p35 = scmp.ge.s32.totalorder %s34, 8
      %s36 = scalar_select %p35, 0, %s34
      %s37 = sadd.s32 1, %s28
      %s38 = scalar_select %p35, %s37, %s28
      %p39 = scmp.ge.s32.totalorder %s38, 1
      %s40 = scalar_select %p39, 0, %s38
      %s41 = ssub.s32 %s29, %s36
      %s42 = ssub.s32 %s28, %s40
      %s43 = sor.u32 %s41, %s42
      %p44 = scmp.eq.s32.totalorder %s43, 0
      %s46 = sadd.s32 %s45, 1
      %s47 = scalar_select %p44, %s45, %s46
      %p50 = pneg %p44
      %p51 = scmp.eq.s32.totalorder %s21, 7
      %p52 = por %p50, %p51
      %p53 = scmp.ne.s32.totalorder %s45, %s48
      %p54 = scmp.eq.s32.totalorder %s21, 0
      %p55 = por %p53, %p54
      %p56 = scmp.ne.s32.totalorder %s45, %s48
      %p57 = scmp.eq.s32.totalorder %s26, 7
      %p58 = por %p56, %p57
      %p59 = scmp.ne.s32.totalorder %s48, %s49
      %p60 = scmp.eq.s32.totalorder %s26, 0
      %p61 = por %p59, %p60
      %p62 = scmp.ne.s32.totalorder %s48, %s49
      %p63 = scmp.eq.s32.totalorder %s27, 7
      %p64 = por %p62, %p63
      %p66 = scmp.ne.s32.totalorder %s49, %s65
      %p67 = scmp.eq.s32.totalorder %s27, 0
      %p68 = por %p66, %p67
      %s70 = sadd.s32 %s69, 1
      %p73 = scmp.eq.s32.totalorder %s21, 7
      %p74 = scmp.ne.s32.totalorder %s69, %s71
      %p75 = scmp.eq.s32.totalorder %s21, 0
      %p76 = por %p74, %p75
      %p77 = scmp.ne.s32.totalorder %s69, %s71
      %p78 = scmp.eq.s32.totalorder %s26, 7
      %p79 = por %p77, %p78
      %p80 = scmp.ne.s32.totalorder %s71, %s72
      %p81 = scmp.eq.s32.totalorder %s26, 0
      %p82 = por %p80, %p81
      %p83 = scmp.ne.s32.totalorder %s71, %s72
      %p84 = scmp.eq.s32.totalorder %s27, 7
      %p85 = por %p83, %p84
      %p87 = scmp.ne.s32.totalorder %s72, %s86
      %p88 = scmp.eq.s32.totalorder %s27, 0
      %p89 = por %p87, %p88
      %s91 = sadd.s32 %s90, 1
      %p94 = scmp.eq.s32.totalorder %s21, 7
      %p95 = scmp.ne.s32.totalorder %s90, %s92
      %p96 = scmp.eq.s32.totalorder %s21, 0
      %p97 = por %p95, %p96
      %p98 = scmp.ne.s32.totalorder %s90, %s92
      %p99 = scmp.eq.s32.totalorder %s26, 7
      %p100 = por %p98, %p99
      %p101 = scmp.ne.s32.totalorder %s92, %s93
      %p102 = scmp.eq.s32.totalorder %s26, 0
      %p103 = por %p101, %p102
      %p104 = scmp.ne.s32.totalorder %s92, %s93
      %p105 = scmp.eq.s32.totalorder %s27, 7
      %p106 = por %p104, %p105
      %p108 = scmp.ne.s32.totalorder %s93, %s107
      %p109 = scmp.eq.s32.totalorder %s27, 0
      %p110 = por %p108, %p109
      %s112 = sadd.s32 %s111, 1
      %p115 = scmp.eq.s32.totalorder %s21, 7
      %p116 = scmp.ne.s32.totalorder %s111, %s113
      %p117 = scmp.eq.s32.totalorder %s21, 0
      %p118 = por %p116, %p117
      %p119 = scmp.ne.s32.totalorder %s111, %s113
      %p120 = scmp.eq.s32.totalorder %s26, 7
      %p121 = por %p119, %p120
      %p122 = scmp.ne.s32.totalorder %s113, %s114
      %p123 = scmp.eq.s32.totalorder %s26, 0
      %p124 = por %p122, %p123
      %p125 = scmp.ne.s32.totalorder %s113, %s114
      %p126 = scmp.eq.s32.totalorder %s27, 7
      %p127 = por %p125, %p126
      %p129 = scmp.ne.s32.totalorder %s114, %s128
      %p130 = scmp.eq.s32.totalorder %s27, 0
      %p131 = por %p129, %p130
      %s133 = sadd.s32 %s132, 1
      %p136 = scmp.eq.s32.totalorder %s21, 7
      %p137 = scmp.ne.s32.totalorder %s132, %s134
      %p138 = scmp.eq.s32.totalorder %s21, 0
      %p139 = por %p137, %p138
      %p140 = scmp.ne.s32.totalorder %s132, %s134
      %p141 = scmp.eq.s32.totalorder %s26, 7
      %p142 = por %p140, %p141
      %p143 = scmp.ne.s32.totalorder %s134, %s135
      %p144 = scmp.eq.s32.totalorder %s26, 0
      %p145 = por %p143, %p144
      %p146 = scmp.ne.s32.totalorder %s134, %s135
      %p147 = scmp.eq.s32.totalorder %s27, 7
      %p148 = por %p146, %p147
      %p150 = scmp.ne.s32.totalorder %s135, %s149
      %p151 = scmp.eq.s32.totalorder %s27, 0
      %p152 = por %p150, %p151
      %s154 = sadd.s32 %s153, 1
      %p157 = scmp.eq.s32.totalorder %s21, 7
      %p158 = scmp.ne.s32.totalorder %s153, %s155
      %p159 = scmp.eq.s32.totalorder %s21, 0
      %p160 = por %p158, %p159
      %p161 = scmp.ne.s32.totalorder %s153, %s155
      %p162 = scmp.eq.s32.totalorder %s26, 7
      %p163 = por %p161, %p162
      %p164 = scmp.ne.s32.totalorder %s155, %s156
      %p165 = scmp.eq.s32.totalorder %s26, 0
      %p166 = por %p164, %p165
      %p167 = scmp.ne.s32.totalorder %s155, %s156
      %p168 = scmp.eq.s32.totalorder %s27, 7
      %p169 = por %p167, %p168
      %p171 = scmp.ne.s32.totalorder %s156, %s170
      %p172 = scmp.eq.s32.totalorder %s27, 0
      %p173 = por %p171, %p172
      %s175 = sadd.s32 %s174, 1
      %p178 = scmp.eq.s32.totalorder %s21, 7
      %p179 = scmp.ne.s32.totalorder %s174, %s176
      %p180 = scmp.eq.s32.totalorder %s21, 0
      %p181 = por %p179, %p180
      %p182 = scmp.ne.s32.totalorder %s174, %s176
      %p183 = scmp.eq.s32.totalorder %s26, 7
      %p184 = por %p182, %p183
      %p185 = scmp.ne.s32.totalorder %s176, %s177
      %p186 = scmp.eq.s32.totalorder %s26, 0
      %p187 = por %p185, %p186
      %p188 = scmp.ne.s32.totalorder %s176, %s177
      %p189 = scmp.eq.s32.totalorder %s27, 7
      %p190 = por %p188, %p189
      %p192 = scmp.ne.s32.totalorder %s177, %s191
      %p193 = scmp.eq.s32.totalorder %s27, 0
      %p194 = por %p192, %p193
      %s196 = sadd.s32 %s195, 1
      %p199 = scmp.eq.s32.totalorder %s21, 7
      %p200 = scmp.ne.s32.totalorder %s195, %s197
      %p201 = scmp.eq.s32.totalorder %s21, 0
      %p202 = por %p200, %p201
      %p203 = scmp.ne.s32.totalorder %s195, %s197
      %p204 = scmp.eq.s32.totalorder %s26, 7
      %p205 = por %p203, %p204
      %p206 = scmp.ne.s32.totalorder %s197, %s198
      %p207 = scmp.eq.s32.totalorder %s26, 0
      %p208 = por %p206, %p207
      %p209 = scmp.ne.s32.totalorder %s197, %s198
      %p210 = scmp.eq.s32.totalorder %s27, 7
      %p211 = por %p209, %p210
      %p213 = scmp.ne.s32.totalorder %s198, %s212
      %p214 = scmp.eq.s32.totalorder %s27, 0
      %p215 = por %p213, %p214
      %s217 = sadd.s32 %s216, 1
      %p220 = scmp.eq.s32.totalorder %s21, 7
      %p221 = scmp.ne.s32.totalorder %s216, %s218
      %p222 = scmp.eq.s32.totalorder %s21, 0
      %p223 = por %p221, %p222
      %p224 = scmp.ne.s32.totalorder %s216, %s218
      %p225 = scmp.eq.s32.totalorder %s26, 7
      %p226 = por %p224, %p225
      %p227 = scmp.ne.s32.totalorder %s218, %s219
      %p228 = scmp.eq.s32.totalorder %s26, 0
      %p229 = por %p227, %p228
      %p230 = scmp.ne.s32.totalorder %s218, %s219
      %p231 = scmp.eq.s32.totalorder %s27, 7
      %p232 = por %p230, %p231
      %p234 = scmp.ne.s32.totalorder %s219, %s233
      %p235 = scmp.eq.s32.totalorder %s27, 0
      %p236 = por %p234, %p235
      %s237 = ssub.s32 %s28, %s40
      %p238 = scmp.eq.s32.totalorder %s237, 0
      %s240 = sadd.s32 %s239, 1
      %s241 = scalar_select %p238, %s239, %s240
      %p244 = pneg %p238
      %p245 = scmp.eq.s32.totalorder %s21, 7
      %p246 = por %p244, %p245
      %p247 = scmp.ne.s32.totalorder %s239, %s242
      %p248 = scmp.eq.s32.totalorder %s21, 0
      %p249 = por %p247, %p248
      %p250 = scmp.ne.s32.totalorder %s239, %s242
      %p251 = scmp.eq.s32.totalorder %s26, 7
      %p252 = por %p250, %p251
      %p253 = scmp.ne.s32.totalorder %s242, %s243
      %p254 = scmp.eq.s32.totalorder %s26, 0
      %p255 = por %p253, %p254
      %p256 = scmp.ne.s32.totalorder %s242, %s243
      %p257 = scmp.eq.s32.totalorder %s27, 7
      %p258 = por %p256, %p257
      %p260 = scmp.ne.s32.totalorder %s243, %s259
      %p261 = scmp.eq.s32.totalorder %s27, 0
      %p262 = por %p260, %p261
      %p263 = scmp.le.s32.totalorder 1, %s21
      %p264 = scmp.lt.s32.totalorder %s21, 9
      %p265 = pnand %p263, %p264
      %p266 = pneg %p265
      // Predicated region
      $region9: #{tpu_custom_call.1} parent=5 // pred_check
        _
      $region10: #{tpu_custom_call.1} parent=5 // pred_check_branch
        %268 = sbr.rel (%p265) target = $region12
      $region11: #{tpu_custom_call.1} parent=5 // pred_region
        %s269 = ssub.s32 %s21, 1
        // Predicated region
        $region13: #{tpu_custom_call.1} parent=11 // pred_check
          %p270 = pneg %p82
        $region14: #{tpu_custom_call.1} parent=11 // pred_check_branch
          %272 = sbr.rel (%p270) target = $region16
        $region15: #{tpu_custom_call.1} parent=11 // pred_region
          %s274 = ssub.s32 12288, 12288
          %275 = vsyncadd [#allocation8], %s274
          %s276 = sshll.u32 [#allocation7], 4
          %s277 = int_to_ptr.vmem [resolvable:$true] %s276
          %282 = dma.hbm_to_vmem [thread:$0]  %s1, 12288, %s277, [#allocation8], 384, 384, 24
        $region16: #{tpu_custom_call.1} parent=11 // pred_fallthru
          _
        // Predicated region
        $region17: #{tpu_custom_call.1} parent=11 // pred_check
          %p283 = pneg %p103
        $region18: #{tpu_custom_call.1} parent=11 // pred_check_branch
          %285 = sbr.rel (%p283) target = $region20
        $region19: #{tpu_custom_call.1} parent=11 // pred_region
          %s287 = ssub.s32 2048, 2048
          %288 = vsyncadd [#allocation8], %s287
          %s289 = sshll.u32 [#allocation9], 4
          %s290 = int_to_ptr.vmem [resolvable:$true] %s289
          %295 = dma.hbm_to_vmem [thread:$0]  %s2, 2048, %s290, [#allocation8], 128, 128, 8
        $region20: #{tpu_custom_call.1} parent=11 // pred_fallthru
          _
        // Predicated region
        $region21: #{tpu_custom_call.1} parent=11 // pred_check
          %p296 = pneg %p124
        $region22: #{tpu_custom_call.1} parent=11 // pred_check_branch
          %298 = sbr.rel (%p296) target = $region24
        $region23: #{tpu_custom_call.1} parent=11 // pred_region
          _
        $region24: #{tpu_custom_call.1} parent=11 // pred_fallthru
          _
        // Predicated region
        $region25: #{tpu_custom_call.1} parent=11 // pred_check
          %p299 = pneg %p145
        $region26: #{tpu_custom_call.1} parent=11 // pred_check_branch
          %301 = sbr.rel (%p299) target = $region28
        $region27: #{tpu_custom_call.1} parent=11 // pred_region
          _
        $region28: #{tpu_custom_call.1} parent=11 // pred_fallthru
          _
        // Predicated region
        $region29: #{tpu_custom_call.1} parent=11 // pred_check
          %p302 = pneg %p166
        $region30: #{tpu_custom_call.1} parent=11 // pred_check_branch
          %304 = sbr.rel (%p302) target = $region32
        $region31: #{tpu_custom_call.1} parent=11 // pred_region
          %s306 = ssub.s32 12288, 12288
          %307 = vsyncadd [#allocation11], %s306
          %s308 = sshll.u32 [#allocation10], 4
          %s309 = int_to_ptr.vmem [resolvable:$true] %s308
          %314 = dma.hbm_to_vmem [thread:$0]  %s5, 12288, %s309, [#allocation11], 384, 384, 24
        $region32: #{tpu_custom_call.1} parent=11 // pred_fallthru
          _
        // Predicated region
        $region33: #{tpu_custom_call.1} parent=11 // pred_check
          %p315 = pneg %p187
        $region34: #{tpu_custom_call.1} parent=11 // pred_check_branch
          %317 = sbr.rel (%p315) target = $region36
        $region35: #{tpu_custom_call.1} parent=11 // pred_region
          %s319 = ssub.s32 2048, 2048
          %320 = vsyncadd [#allocation11], %s319
          %s321 = sshll.u32 [#allocation12], 4
          %s322 = int_to_ptr.vmem [resolvable:$true] %s321
          %327 = dma.hbm_to_vmem [thread:$0]  %s6, 2048, %s322, [#allocation11], 128, 128, 8
        $region36: #{tpu_custom_call.1} parent=11 // pred_fallthru
          _
        // Predicated region
        $region37: #{tpu_custom_call.1} parent=11 // pred_check
          %p328 = pneg %p208
        $region38: #{tpu_custom_call.1} parent=11 // pred_check_branch
          %330 = sbr.rel (%p328) target = $region40
        $region39: #{tpu_custom_call.1} parent=11 // pred_region
          _
        $region40: #{tpu_custom_call.1} parent=11 // pred_fallthru
          _
        // Predicated region
        $region41: #{tpu_custom_call.1} parent=11 // pred_check
          %p331 = pneg %p229
        $region42: #{tpu_custom_call.1} parent=11 // pred_check_branch
          %333 = sbr.rel (%p331) target = $region44
        $region43: #{tpu_custom_call.1} parent=11 // pred_region
          _
        $region44: #{tpu_custom_call.1} parent=11 // pred_fallthru
          _
      $region12: #{tpu_custom_call.1} parent=5 // pred_fallthru
        _
      %p334 = scmp.lt.s32.totalorder %s21, 8
      // Predicated region
      $region45: #{tpu_custom_call.1} parent=5 // pred_check
        %p335 = pneg %p334
      $region46: #{tpu_custom_call.1} parent=5 // pred_check_branch
        %337 = sbr.rel (%p335) target = $region48
      $region47: #{tpu_custom_call.1} parent=5 // pred_region
        // Predicated region
        $region49: #{tpu_custom_call.1} parent=47 // pred_check
          %p338 = pneg %p55
        $region50: #{tpu_custom_call.1} parent=47 // pred_check_branch
          %340 = sbr.rel (%p338) target = $region52
        $region51: #{tpu_custom_call.1} parent=47 // pred_region
          %s341 = sand.u32 %s45, 1
          %s342 = scalar_lea.sflag [#allocation5], %s341
          %s343 = sand.u32 %s45, 1
          %s344 = smul.addr %s343, 8
          %s345 = scalar_lea.vmem [#allocation4], %s344
          %s347 = ssub.s32 128, 128
          %348 = vsyncadd %s342, %s347
          %s349 = sadd.s32 %s28, %s29
          %s350 = smul.addr %s349, 128
          %s351 = scalar_lea.hbm %s0, %s350
          %s353 = sshll.u32 %s345, 4
          %s354 = int_to_ptr.vmem [resolvable:$true] %s353
          %356 = dma.hbm_to_vmem [thread:$0]  %s351, 128, %s354, %s342
        $region52: #{tpu_custom_call.1} parent=47 // pred_fallthru
          _
      $region48: #{tpu_custom_call.1} parent=5 // pred_fallthru
        _
      %p357 = scmp.le.s32.totalorder 1, %s21
      %p358 = scmp.lt.s32.totalorder %s21, 9
      %p359 = pnand %p357, %p358
      %p360 = pneg %p359
      // Predicated region
      $region53: #{tpu_custom_call.1} parent=5 // pred_check
        _
      $region54: #{tpu_custom_call.1} parent=5 // pred_check_branch
        %362 = sbr.rel (%p359) target = $region56
      $region55: #{tpu_custom_call.1} parent=5 // pred_region
        %s363 = ssub.s32 %s21, 1
        %s364 = sand.u32 %s48, 1
        %s365 = scalar_lea.sflag [#allocation5], %s364
        %s366 = sand.u32 %s48, 1
        %s367 = smul.addr %s366, 8
        %s368 = scalar_lea.vmem [#allocation4], %s367
        // Predicated region
        $region57: #{tpu_custom_call.1} parent=55 // pred_check
          %p369 = pneg %p61
        $region58: #{tpu_custom_call.1} parent=55 // pred_check_branch
          %371 = sbr.rel (%p369) target = $region60
        $region59: #{tpu_custom_call.1} parent=55 // pred_region
          %372 = dma.done %s365, 128
        $region60: #{tpu_custom_call.1} parent=55 // pred_fallthru
          _
        // Predicated region
        $region61: #{tpu_custom_call.1} parent=55 // pred_check
          %p373 = pneg %p82
        $region62: #{tpu_custom_call.1} parent=55 // pred_check_branch
          %375 = sbr.rel (%p373) target = $region64
        $region63: #{tpu_custom_call.1} parent=55 // pred_region
          %376 = dma.done [#allocation8], 12288
        $region64: #{tpu_custom_call.1} parent=55 // pred_fallthru
          _
        // Predicated region
        $region65: #{tpu_custom_call.1} parent=55 // pred_check
          %p377 = pneg %p103
        $region66: #{tpu_custom_call.1} parent=55 // pred_check_branch
          %379 = sbr.rel (%p377) target = $region68
        $region67: #{tpu_custom_call.1} parent=55 // pred_region
          %380 = dma.done [#allocation8], 2048
        $region68: #{tpu_custom_call.1} parent=55 // pred_fallthru
          _
        // Predicated region
        $region69: #{tpu_custom_call.1} parent=55 // pred_check
          %p381 = pneg %p166
        $region70: #{tpu_custom_call.1} parent=55 // pred_check_branch
          %383 = sbr.rel (%p381) target = $region72
        $region71: #{tpu_custom_call.1} parent=55 // pred_region
          %384 = dma.done [#allocation11], 12288
        $region72: #{tpu_custom_call.1} parent=55 // pred_fallthru
          _
        // Predicated region
        $region73: #{tpu_custom_call.1} parent=55 // pred_check
          %p385 = pneg %p187
        $region74: #{tpu_custom_call.1} parent=55 // pred_check_branch
          %387 = sbr.rel (%p385) target = $region76
        $region75: #{tpu_custom_call.1} parent=55 // pred_region
          %388 = dma.done [#allocation11], 2048
        $region76: #{tpu_custom_call.1} parent=55 // pred_fallthru
          _
        %s389 = sand.u32 %s48, 1
        %s390 = scalar_lea.sflag [#allocation5], %s389
        %s391 = sand.u32 %s48, 1
        %s392 = smul.addr %s391, 8
        %s393 = scalar_lea.vmem [#allocation4], %s392
        %p394 = pneg %p61
        %p395 = pneg %p58
        %p396 = pneg %p82
        %p397 = pneg %p79
        %p398 = pneg %p103
        %p399 = pneg %p100
        %p400 = pneg %p124
        %p401 = pneg %p121
        %p402 = pneg %p145
        %p403 = pneg %p142
        %p404 = pneg %p166
        %p405 = pneg %p163
        %p406 = pneg %p187
        %p407 = pneg %p184
        %p408 = pneg %p208
        %p409 = pneg %p205
        %p410 = pneg %p229
        %p411 = pneg %p226
        %p412 = pneg %p255
        %p413 = pneg %p252
        %p414 = scmp.eq.s32.totalorder %s31, 0
        // Predicated region
        $region77: #{tpu_custom_call.1} parent=55 // pred_check
          %p415 = pneg %p414
        $region78: #{tpu_custom_call.1} parent=55 // pred_check_branch
          %417 = sbr.rel (%p415) target = $region80
        $region79: #{tpu_custom_call.1} parent=55 // pred_region
          %418 = vst [vmem:[#allocation2] sm:$0xff] 0.0
          %419 = vst [vmem:[#allocation3] sm:$0xff] 0.0
        $region80: #{tpu_custom_call.1} parent=55 // pred_fallthru
          _
        %v420 = vld [vmem:[%s368] sm:$0xff]
        %v421 = vld [vmem:[#allocation2] sm:$0xff]
        %v422 = vld [vmem:[#allocation7] sm:$0xff]
        %v423 = vld [vmem:[#allocation7 + $0x8] sm:$0xff]
        %v424 = vld [vmem:[#allocation7 + $0x10] sm:$0xff]
        %v425 = vld [vmem:[#allocation7 + $0x18] sm:$0xff]
        %v426 = vld [vmem:[#allocation7 + $0x20] sm:$0xff]
        %v427 = vld [vmem:[#allocation7 + $0x28] sm:$0xff]
        %v428 = vld [vmem:[#allocation7 + $0x30] sm:$0xff]
        %v429 = vld [vmem:[#allocation7 + $0x38] sm:$0xff]
        %v430 = vld [vmem:[#allocation7 + $0x40] sm:$0xff]
        %v431 = vld [vmem:[#allocation7 + $0x48] sm:$0xff]
        %v432 = vld [vmem:[#allocation7 + $0x50] sm:$0xff]
        %v433 = vld [vmem:[#allocation7 + $0x58] sm:$0xff]
        %v434 = vld [vmem:[#allocation7 + $0x60] sm:$0xff]
        %v435 = vld [vmem:[#allocation7 + $0x68] sm:$0xff]
        %v436 = vld [vmem:[#allocation7 + $0x70] sm:$0xff]
        %v437 = vld [vmem:[#allocation7 + $0x78] sm:$0xff]
        %v438 = vld [vmem:[#allocation7 + $0x80] sm:$0xff]
        %v439 = vld [vmem:[#allocation7 + $0x88] sm:$0xff]
        %v440 = vld [vmem:[#allocation7 + $0x90] sm:$0xff]
        %v441 = vld [vmem:[#allocation7 + $0x98] sm:$0xff]
        %v442 = vld [vmem:[#allocation7 + $0xa0] sm:$0xff]
        %v443 = vld [vmem:[#allocation7 + $0xa8] sm:$0xff]
        %v444 = vld [vmem:[#allocation7 + $0xb0] sm:$0xff]
        %v445 = vld [vmem:[#allocation7 + $0xb8] sm:$0xff]
        %v446 = vld [vmem:[#allocation7 + $0xc0] sm:$0xff]
        %v447 = vld [vmem:[#allocation7 + $0xc8] sm:$0xff]
        %v448 = vld [vmem:[#allocation7 + $0xd0] sm:$0xff]
        %v449 = vld [vmem:[#allocation7 + $0xd8] sm:$0xff]
        %v450 = vld [vmem:[#allocation7 + $0xe0] sm:$0xff]
        %v451 = vld [vmem:[#allocation7 + $0xe8] sm:$0xff]
        %v452 = vld [vmem:[#allocation7 + $0xf0] sm:$0xff]
        %v453 = vld [vmem:[#allocation7 + $0xf8] sm:$0xff]
        %v454 = vld [vmem:[#allocation7 + $0x100] sm:$0xff]
        %v455 = vld [vmem:[#allocation7 + $0x108] sm:$0xff]
        %v456 = vld [vmem:[#allocation7 + $0x110] sm:$0xff]
        %v457 = vld [vmem:[#allocation7 + $0x118] sm:$0xff]
        %v458 = vld [vmem:[#allocation7 + $0x120] sm:$0xff]
        %v459 = vld [vmem:[#allocation7 + $0x128] sm:$0xff]
        %v460 = vld [vmem:[#allocation7 + $0x130] sm:$0xff]
        %v461 = vld [vmem:[#allocation7 + $0x138] sm:$0xff]
        %v462 = vld [vmem:[#allocation7 + $0x140] sm:$0xff]
        %v463 = vld [vmem:[#allocation7 + $0x148] sm:$0xff]
        %v464 = vld [vmem:[#allocation7 + $0x150] sm:$0xff]
        %v465 = vld [vmem:[#allocation7 + $0x158] sm:$0xff]
        %v466 = vld [vmem:[#allocation7 + $0x160] sm:$0xff]
        %v467 = vld [vmem:[#allocation7 + $0x168] sm:$0xff]
        %v468 = vld [vmem:[#allocation7 + $0x170] sm:$0xff]
        %v469 = vld [vmem:[#allocation7 + $0x178] sm:$0xff]
        %v470 = vld [vmem:[#allocation7 + $0x180] sm:$0xff]
        %v471 = vld [vmem:[#allocation7 + $0x188] sm:$0xff]
        %v472 = vld [vmem:[#allocation7 + $0x190] sm:$0xff]
        %v473 = vld [vmem:[#allocation7 + $0x198] sm:$0xff]
        %v474 = vld [vmem:[#allocation7 + $0x1a0] sm:$0xff]
        %v475 = vld [vmem:[#allocation7 + $0x1a8] sm:$0xff]
        %v476 = vld [vmem:[#allocation7 + $0x1b0] sm:$0xff]
        %v477 = vld [vmem:[#allocation7 + $0x1b8] sm:$0xff]
        %v478 = vld [vmem:[#allocation7 + $0x1c0] sm:$0xff]
        %v479 = vld [vmem:[#allocation7 + $0x1c8] sm:$0xff]
        %v480 = vld [vmem:[#allocation7 + $0x1d0] sm:$0xff]
        %v481 = vld [vmem:[#allocation7 + $0x1d8] sm:$0xff]
        %v482 = vld [vmem:[#allocation7 + $0x1e0] sm:$0xff]
        %v483 = vld [vmem:[#allocation7 + $0x1e8] sm:$0xff]
        %v484 = vld [vmem:[#allocation7 + $0x1f0] sm:$0xff]
        %v485 = vld [vmem:[#allocation7 + $0x1f8] sm:$0xff]
        %v486 = vld [vmem:[#allocation7 + $0x200] sm:$0xff]
        %v487 = vld [vmem:[#allocation7 + $0x208] sm:$0xff]
        %v488 = vld [vmem:[#allocation7 + $0x210] sm:$0xff]
        %v489 = vld [vmem:[#allocation7 + $0x218] sm:$0xff]
        %v490 = vld [vmem:[#allocation7 + $0x220] sm:$0xff]
        %v491 = vld [vmem:[#allocation7 + $0x228] sm:$0xff]
        %v492 = vld [vmem:[#allocation7 + $0x230] sm:$0xff]
        %v493 = vld [vmem:[#allocation7 + $0x238] sm:$0xff]
        %v494 = vld [vmem:[#allocation7 + $0x240] sm:$0xff]
        %v495 = vld [vmem:[#allocation7 + $0x248] sm:$0xff]
        %v496 = vld [vmem:[#allocation7 + $0x250] sm:$0xff]
        %v497 = vld [vmem:[#allocation7 + $0x258] sm:$0xff]
        %v498 = vld [vmem:[#allocation7 + $0x260] sm:$0xff]
        %v499 = vld [vmem:[#allocation7 + $0x268] sm:$0xff]
        %v500 = vld [vmem:[#allocation7 + $0x270] sm:$0xff]
        %v501 = vld [vmem:[#allocation7 + $0x278] sm:$0xff]
        %v502 = vld [vmem:[#allocation7 + $0x280] sm:$0xff]
        %v503 = vld [vmem:[#allocation7 + $0x288] sm:$0xff]
        %v504 = vld [vmem:[#allocation7 + $0x290] sm:$0xff]
        %v505 = vld [vmem:[#allocation7 + $0x298] sm:$0xff]
        %v506 = vld [vmem:[#allocation7 + $0x2a0] sm:$0xff]
        %v507 = vld [vmem:[#allocation7 + $0x2a8] sm:$0xff]
        %v508 = vld [vmem:[#allocation7 + $0x2b0] sm:$0xff]
        %v509 = vld [vmem:[#allocation7 + $0x2b8] sm:$0xff]
        %v510 = vld [vmem:[#allocation7 + $0x2c0] sm:$0xff]
        %v511 = vld [vmem:[#allocation7 + $0x2c8] sm:$0xff]
        %v512 = vld [vmem:[#allocation7 + $0x2d0] sm:$0xff]
        %v513 = vld [vmem:[#allocation7 + $0x2d8] sm:$0xff]
        %v514 = vld [vmem:[#allocation7 + $0x2e0] sm:$0xff]
        %v515 = vld [vmem:[#allocation7 + $0x2e8] sm:$0xff]
        %v516 = vld [vmem:[#allocation7 + $0x2f0] sm:$0xff]
        %v517 = vld [vmem:[#allocation7 + $0x2f8] sm:$0xff]
        %v518 = vld [vmem:[#allocation9] sm:$0xff]
        %v519 = vld [vmem:[#allocation9 + $0x8] sm:$0xff]
        %v520 = vld [vmem:[#allocation9 + $0x10] sm:$0xff]
        %v521 = vld [vmem:[#allocation9 + $0x18] sm:$0xff]
        %v522 = vld [vmem:[#allocation9 + $0x20] sm:$0xff]
        %v523 = vld [vmem:[#allocation9 + $0x28] sm:$0xff]
        %v524 = vld [vmem:[#allocation9 + $0x30] sm:$0xff]
        %v525 = vld [vmem:[#allocation9 + $0x38] sm:$0xff]
        %v526 = vld [vmem:[#allocation9 + $0x40] sm:$0xff]
        %v527 = vld [vmem:[#allocation9 + $0x48] sm:$0xff]
        %v528 = vld [vmem:[#allocation9 + $0x50] sm:$0xff]
        %v529 = vld [vmem:[#allocation9 + $0x58] sm:$0xff]
        %v530 = vld [vmem:[#allocation9 + $0x60] sm:$0xff]
        %v531 = vld [vmem:[#allocation9 + $0x68] sm:$0xff]
        %v532 = vld [vmem:[#allocation9 + $0x70] sm:$0xff]
        %v533 = vld [vmem:[#allocation9 + $0x78] sm:$0xff]
        %v534 = vld [vmem:[%s3] sm:$0x7]
        %v535 = vld [vmem:[%s4] sm:$0x1]
        %v537 = vlaneseq
        %v538 = vshrl.u32 %v537, 7
        %v539 = vsub.s32 0, %v538
        %v540 = vrot.slane %v534, %v539
        %v541 = vlaneseq
        %v542 = vshrl.u32 %v541, 7
        %v543 = vsub.s32 1, %v542
        %v544 = vrot.slane %v534, %v543
        %v545 = vlaneseq
        %v546 = vshrl.u32 %v545, 7
        %v547 = vsub.s32 2, %v546
        %v548 = vrot.slane %v534, %v547
        %552 = vmatprep.subr.mxu0 %v423
        %553 = vmatpush1.msra.mxu0 %v422
        %554 = vmatprep.subr.mxu0 %v426
        %555 = vmatpush1.msra.mxu0 %v425
        %556 = vmatprep.subr.mxu0 %v429
        %557 = vmatpush1.msra.mxu0 %v428
        %558 = vmatprep.subr.mxu0 %v432
        %559 = vmatpush1.msra.mxu0 %v431
        %560 = vmatprep.subr.mxu0 %v435
        %561 = vmatpush1.msra.mxu0 %v434
        %562 = vmatprep.subr.mxu0 %v438
        %563 = vmatpush1.msra.mxu0 %v437
        %564 = vmatprep.subr.mxu0 %v441
        %565 = vmatpush1.msra.mxu0 %v440
        %566 = vmatprep.subr.mxu0 %v444
        %567 = vmatpush1.msra.mxu0 %v443
        %568 = vmatprep.subr.mxu0 %v447
        %569 = vmatpush1.msra.mxu0 %v446
        %570 = vmatprep.subr.mxu0 %v450
        %571 = vmatpush1.msra.mxu0 %v449
        %572 = vmatprep.subr.mxu0 %v453
        %573 = vmatpush1.msra.mxu0 %v452
        %574 = vmatprep.subr.mxu0 %v456
        %575 = vmatpush1.msra.mxu0 %v455
        %576 = vmatprep.subr.mxu0 %v459
        %577 = vmatpush1.msra.mxu0 %v458
        %578 = vmatprep.subr.mxu0 %v462
        %579 = vmatpush1.msra.mxu0 %v461
        %580 = vmatprep.subr.mxu0 %v465
        %581 = vmatpush1.msra.mxu0 %v464
        %582 = vmatprep.subr.mxu0 %v468
        %583 = vmatpush1.msra.mxu0 %v467
        %584 = vmatprep.subr.mxu0 %v471
        %585 = vmatpush1.msra.mxu0 %v470
        %586 = vmatprep.subr.mxu0 %v474
        %587 = vmatpush1.msra.mxu0 %v473
        %588 = vmatprep.subr.mxu0 %v477
        %589 = vmatpush1.msra.mxu0 %v476
        %590 = vmatprep.subr.mxu0 %v480
        %591 = vmatpush1.msra.mxu0 %v479
        %592 = vmatprep.subr.mxu0 %v483
        %593 = vmatpush1.msra.mxu0 %v482
        %594 = vmatprep.subr.mxu0 %v486
        %595 = vmatpush1.msra.mxu0 %v485
        %596 = vmatprep.subr.mxu0 %v489
        %597 = vmatpush1.msra.mxu0 %v488
        %598 = vmatprep.subr.mxu0 %v492
        %599 = vmatpush1.msra.mxu0 %v491
        %600 = vmatprep.subr.mxu0 %v495
        %601 = vmatpush1.msra.mxu0 %v494
        %602 = vmatprep.subr.mxu0 %v498
        %603 = vmatpush1.msra.mxu0 %v497
        %604 = vmatprep.subr.mxu0 %v501
        %605 = vmatpush1.msra.mxu0 %v500
        %606 = vmatprep.subr.mxu0 %v504
        %607 = vmatpush1.msra.mxu0 %v503
        %608 = vmatprep.subr.mxu0 %v507
        %609 = vmatpush1.msra.mxu0 %v506
        %610 = vmatprep.subr.mxu0 %v510
        %611 = vmatpush1.msra.mxu0 %v509
        %612 = vmatprep.subr.mxu0 %v513
        %613 = vmatpush1.msra.mxu0 %v512
        %614 = vmatprep.subr.mxu0 %v516
        %615 = vmatpush1.msra.mxu0 %v515
        %616 = vmatprep.mubr.f32.mxu0 %v421
        %617 = vmatmul.mubr.f32.gmra.mrb[0].mxu0 %v420
        %v618 = vpop.f32.mrb[0].mxu0
        %v619 = vadd.f32 %v540, %v618
        %v620 = vpop.f32.mrb[0].mxu0
        %v621 = vadd.f32 %v544, %v620
        %622 = vdwg.mxu0
        %623 = vmatprep.subr.mxu0 0.0
        %624 = vmatpush1.msra.mxu0 %v424
        %625 = vmatprep.subr.mxu0 0.0
        %626 = vmatpush1.msra.mxu0 %v427
        %627 = vmatprep.subr.mxu0 0.0
        %628 = vmatpush1.msra.mxu0 %v430
        %629 = vmatprep.subr.mxu0 0.0
        %630 = vmatpush1.msra.mxu0 %v433
        %631 = vmatprep.subr.mxu0 0.0
        %632 = vmatpush1.msra.mxu0 %v436
        %633 = vmatprep.subr.mxu0 0.0
        %634 = vmatpush1.msra.mxu0 %v439
        %635 = vmatprep.subr.mxu0 0.0
        %636 = vmatpush1.msra.mxu0 %v442
        %637 = vmatprep.subr.mxu0 0.0
        %638 = vmatpush1.msra.mxu0 %v445
        %639 = vmatprep.subr.mxu0 0.0
        %640 = vmatpush1.msra.mxu0 %v448
        %641 = vmatprep.subr.mxu0 0.0
        %642 = vmatpush1.msra.mxu0 %v451
        %643 = vmatprep.subr.mxu0 0.0
        %644 = vmatpush1.msra.mxu0 %v454
        %645 = vmatprep.subr.mxu0 0.0
        %646 = vmatpush1.msra.mxu0 %v457
        %647 = vmatprep.subr.mxu0 0.0
        %648 = vmatpush1.msra.mxu0 %v460
        %649 = vmatprep.subr.mxu0 0.0
        %650 = vmatpush1.msra.mxu0 %v463
        %651 = vmatprep.subr.mxu0 0.0
        %652 = vmatpush1.msra.mxu0 %v466
        %653 = vmatprep.subr.mxu0 0.0
        %654 = vmatpush1.msra.mxu0 %v469
        %655 = vmatprep.subr.mxu0 0.0
        %656 = vmatpush1.msra.mxu0 %v472
        %657 = vmatprep.subr.mxu0 0.0
        %658 = vmatpush1.msra.mxu0 %v475
        %659 = vmatprep.subr.mxu0 0.0
        %660 = vmatpush1.msra.mxu0 %v478
        %661 = vmatprep.subr.mxu0 0.0
        %662 = vmatpush1.msra.mxu0 %v481
        %663 = vmatprep.subr.mxu0 0.0
        %664 = vmatpush1.msra.mxu0 %v484
        %665 = vmatprep.subr.mxu0 0.0
        %666 = vmatpush1.msra.mxu0 %v487
        %667 = vmatprep.subr.mxu0 0.0
        %668 = vmatpush1.msra.mxu0 %v490
        %669 = vmatprep.subr.mxu0 0.0
        %670 = vmatpush1.msra.mxu0 %v493
        %671 = vmatprep.subr.mxu0 0.0
        %672 = vmatpush1.msra.mxu0 %v496
        %673 = vmatprep.subr.mxu0 0.0
        %674 = vmatpush1.msra.mxu0 %v499
        %675 = vmatprep.subr.mxu0 0.0
        %676 = vmatpush1.msra.mxu0 %v502
        %677 = vmatprep.subr.mxu0 0.0
        %678 = vmatpush1.msra.mxu0 %v505
        %679 = vmatprep.subr.mxu0 0.0
        %680 = vmatpush1.msra.mxu0 %v508
        %681 = vmatprep.subr.mxu0 0.0
        %682 = vmatpush1.msra.mxu0 %v511
        %683 = vmatprep.subr.mxu0 0.0
        %684 = vmatpush1.msra.mxu0 %v514
        %685 = vmatprep.subr.mxu0 0.0
        %686 = vmatpush1.msra.mxu0 %v517
        %687 = vmatprep.mubr.f32.mxu0 %v421
        %688 = vmatmul.mubr.f32.gmra.mrb[0].mxu0 %v420
        %v689 = vpop.f32.mrb[0].mxu0
        %v690 = vadd.f32 %v548, %v689
        %v691 = vpop.f32.mrb[0].mxu0
        %692 = vdwg.mxu0
        %v693 = vxor.u32 %v619, 2147483648
        %v694 = vxor.u32 %v621, 2147483648
        %v695 = vmul.f32 %v693, 1.442695
        %v696 = vpow.pop %v695
        %v697 = vmul.f32 %v694, 1.442695
        %v698 = vpow.pop %v697
        %v699 = vadd.f32 %v696, 1.0
        %v700 = vadd.f32 %v698, 1.0
        %v701 = vrcp.pop %v699
        %v702 = vmul.f32 1.0, %v701
        %v703 = vrcp.pop %v700
        %v704 = vmul.f32 1.0, %v703
        %v706 = vlaneseq
        %v707 = vshrl.u32 %v706, 7
        %v708 = vsub.s32 0, %v707
        %v709 = vrot.slane %v535, %v708
        %711 = vmatprep.subr.mxu0 0.0
        %712 = vmatpush1.msra.mxu0 %v518
        %713 = vmatprep.subr.mxu0 0.0
        %714 = vmatpush1.msra.mxu0 %v519
        %715 = vmatprep.subr.mxu0 0.0
        %716 = vmatpush1.msra.mxu0 %v520
        %717 = vmatprep.subr.mxu0 0.0
        %718 = vmatpush1.msra.mxu0 %v521
        %719 = vmatprep.subr.mxu0 0.0
        %720 = vmatpush1.msra.mxu0 %v522
        %721 = vmatprep.subr.mxu0 0.0
        %722 = vmatpush1.msra.mxu0 %v523
        %723 = vmatprep.subr.mxu0 0.0
        %724 = vmatpush1.msra.mxu0 %v524
        %725 = vmatprep.subr.mxu0 0.0
        %726 = vmatpush1.msra.mxu0 %v525
        %727 = vmatprep.subr.mxu0 0.0
        %728 = vmatpush1.msra.mxu0 %v526
        %729 = vmatprep.subr.mxu0 0.0
        %730 = vmatpush1.msra.mxu0 %v527
        %731 = vmatprep.subr.mxu0 0.0
        %732 = vmatpush1.msra.mxu0 %v528
        %733 = vmatprep.subr.mxu0 0.0
        %734 = vmatpush1.msra.mxu0 %v529
        %735 = vmatprep.subr.mxu0 0.0
        %736 = vmatpush1.msra.mxu0 %v530
        %737 = vmatprep.subr.mxu0 0.0
        %738 = vmatpush1.msra.mxu0 %v531
        %739 = vmatprep.subr.mxu0 0.0
        %740 = vmatpush1.msra.mxu0 %v532
        %741 = vmatprep.subr.mxu0 0.0
        %742 = vmatpush1.msra.mxu0 %v533
        %743 = vmatprep.subr.mxu0 0.0
        %744 = vmatpush1.msra.mxu0 0.0
        %745 = vmatprep.subr.mxu0 0.0
        %746 = vmatpush1.msra.mxu0 0.0
        %747 = vmatprep.subr.mxu0 0.0
        %748 = vmatpush1.msra.mxu0 0.0
        %749 = vmatprep.subr.mxu0 0.0
        %750 = vmatpush1.msra.mxu0 0.0
        %751 = vmatprep.subr.mxu0 0.0
        %752 = vmatpush1.msra.mxu0 0.0
        %753 = vmatprep.subr.mxu0 0.0
        %754 = vmatpush1.msra.mxu0 0.0
        %755 = vmatprep.subr.mxu0 0.0
        %756 = vmatpush1.msra.mxu0 0.0
        %757 = vmatprep.subr.mxu0 0.0
        %758 = vmatpush1.msra.mxu0 0.0
        %759 = vmatprep.subr.mxu0 0.0
        %760 = vmatpush1.msra.mxu0 0.0
        %761 = vmatprep.subr.mxu0 0.0
        %762 = vmatpush1.msra.mxu0 0.0
        %763 = vmatprep.subr.mxu0 0.0
        %764 = vmatpush1.msra.mxu0 0.0
        %765 = vmatprep.subr.mxu0 0.0
        %766 = vmatpush1.msra.mxu0 0.0
        %767 = vmatprep.subr.mxu0 0.0
        %768 = vmatpush1.msra.mxu0 0.0
        %769 = vmatprep.subr.mxu0 0.0
        %770 = vmatpush1.msra.mxu0 0.0
        %771 = vmatprep.subr.mxu0 0.0
        %772 = vmatpush1.msra.mxu0 0.0
        %773 = vmatprep.subr.mxu0 0.0
        %774 = vmatpush1.msra.mxu0 0.0
        %775 = vmatprep.mubr.f32.mxu0 0.0
        %776 = vmatmul.mubr.f32.gmra.mrb[0].mxu0 %v421
        %v777 = vpop.f32.mrb[0].mxu0
        %v778 = vadd.f32 %v709, %v777
        %v779 = vpop.f32.mrb[0].mxu0
        %780 = vdwg.mxu0
        %v781 = vmul.f32 %v702, %v778
        %v782 = vadd.f32 %v690, %v781
        %v783 = vtanh.pop %v782
        %v784 = vsub.f32 1.0, %v704
        %v785 = vmul.f32 %v784, %v783
        %v786 = vmul.f32 %v704, %v421
        %v787 = vadd.f32 %v785, %v786
        %v788 = vld [vmem:[#allocation3] sm:$0xff]
        %v789 = vld [vmem:[#allocation10] sm:$0xff]
        %v790 = vld [vmem:[#allocation10 + $0x8] sm:$0xff]
        %v791 = vld [vmem:[#allocation10 + $0x10] sm:$0xff]
        %v792 = vld [vmem:[#allocation10 + $0x18] sm:$0xff]
        %v793 = vld [vmem:[#allocation10 + $0x20] sm:$0xff]
        %v794 = vld [vmem:[#allocation10 + $0x28] sm:$0xff]
        %v795 = vld [vmem:[#allocation10 + $0x30] sm:$0xff]
        %v796 = vld [vmem:[#allocation10 + $0x38] sm:$0xff]
        %v797 = vld [vmem:[#allocation10 + $0x40] sm:$0xff]
        %v798 = vld [vmem:[#allocation10 + $0x48] sm:$0xff]
        %v799 = vld [vmem:[#allocation10 + $0x50] sm:$0xff]
        %v800 = vld [vmem:[#allocation10 + $0x58] sm:$0xff]
        %v801 = vld [vmem:[#allocation10 + $0x60] sm:$0xff]
        %v802 = vld [vmem:[#allocation10 + $0x68] sm:$0xff]
        %v803 = vld [vmem:[#allocation10 + $0x70] sm:$0xff]
        %v804 = vld [vmem:[#allocation10 + $0x78] sm:$0xff]
        %v805 = vld [vmem:[#allocation10 + $0x80] sm:$0xff]
        %v806 = vld [vmem:[#allocation10 + $0x88] sm:$0xff]
        %v807 = vld [vmem:[#allocation10 + $0x90] sm:$0xff]
        %v808 = vld [vmem:[#allocation10 + $0x98] sm:$0xff]
        %v809 = vld [vmem:[#allocation10 + $0xa0] sm:$0xff]
        %v810 = vld [vmem:[#allocation10 + $0xa8] sm:$0xff]
        %v811 = vld [vmem:[#allocation10 + $0xb0] sm:$0xff]
        %v812 = vld [vmem:[#allocation10 + $0xb8] sm:$0xff]
        %v813 = vld [vmem:[#allocation10 + $0xc0] sm:$0xff]
        %v814 = vld [vmem:[#allocation10 + $0xc8] sm:$0xff]
        %v815 = vld [vmem:[#allocation10 + $0xd0] sm:$0xff]
        %v816 = vld [vmem:[#allocation10 + $0xd8] sm:$0xff]
        %v817 = vld [vmem:[#allocation10 + $0xe0] sm:$0xff]
        %v818 = vld [vmem:[#allocation10 + $0xe8] sm:$0xff]
        %v819 = vld [vmem:[#allocation10 + $0xf0] sm:$0xff]
        %v820 = vld [vmem:[#allocation10 + $0xf8] sm:$0xff]
        %v821 = vld [vmem:[#allocation10 + $0x100] sm:$0xff]
        %v822 = vld [vmem:[#allocation10 + $0x108] sm:$0xff]
        %v823 = vld [vmem:[#allocation10 + $0x110] sm:$0xff]
        %v824 = vld [vmem:[#allocation10 + $0x118] sm:$0xff]
        %v825 = vld [vmem:[#allocation10 + $0x120] sm:$0xff]
        %v826 = vld [vmem:[#allocation10 + $0x128] sm:$0xff]
        %v827 = vld [vmem:[#allocation10 + $0x130] sm:$0xff]
        %v828 = vld [vmem:[#allocation10 + $0x138] sm:$0xff]
        %v829 = vld [vmem:[#allocation10 + $0x140] sm:$0xff]
        %v830 = vld [vmem:[#allocation10 + $0x148] sm:$0xff]
        %v831 = vld [vmem:[#allocation10 + $0x150] sm:$0xff]
        %v832 = vld [vmem:[#allocation10 + $0x158] sm:$0xff]
        %v833 = vld [vmem:[#allocation10 + $0x160] sm:$0xff]
        %v834 = vld [vmem:[#allocation10 + $0x168] sm:$0xff]
        %v835 = vld [vmem:[#allocation10 + $0x170] sm:$0xff]
        %v836 = vld [vmem:[#allocation10 + $0x178] sm:$0xff]
        %v837 = vld [vmem:[#allocation10 + $0x180] sm:$0xff]
        %v838 = vld [vmem:[#allocation10 + $0x188] sm:$0xff]
        %v839 = vld [vmem:[#allocation10 + $0x190] sm:$0xff]
        %v840 = vld [vmem:[#allocation10 + $0x198] sm:$0xff]
        %v841 = vld [vmem:[#allocation10 + $0x1a0] sm:$0xff]
        %v842 = vld [vmem:[#allocation10 + $0x1a8] sm:$0xff]
        %v843 = vld [vmem:[#allocation10 + $0x1b0] sm:$0xff]
        %v844 = vld [vmem:[#allocation10 + $0x1b8] sm:$0xff]
        %v845 = vld [vmem:[#allocation10 + $0x1c0] sm:$0xff]
        %v846 = vld [vmem:[#allocation10 + $0x1c8] sm:$0xff]
        %v847 = vld [vmem:[#allocation10 + $0x1d0] sm:$0xff]
        %v848 = vld [vmem:[#allocation10 + $0x1d8] sm:$0xff]
        %v849 = vld [vmem:[#allocation10 + $0x1e0] sm:$0xff]
        %v850 = vld [vmem:[#allocation10 + $0x1e8] sm:$0xff]
        %v851 = vld [vmem:[#allocation10 + $0x1f0] sm:$0xff]
        %v852 = vld [vmem:[#allocation10 + $0x1f8] sm:$0xff]
        %v853 = vld [vmem:[#allocation10 + $0x200] sm:$0xff]
        %v854 = vld [vmem:[#allocation10 + $0x208] sm:$0xff]
        %v855 = vld [vmem:[#allocation10 + $0x210] sm:$0xff]
        %v856 = vld [vmem:[#allocation10 + $0x218] sm:$0xff]
        %v857 = vld [vmem:[#allocation10 + $0x220] sm:$0xff]
        %v858 = vld [vmem:[#allocation10 + $0x228] sm:$0xff]
        %v859 = vld [vmem:[#allocation10 + $0x230] sm:$0xff]
        %v860 = vld [vmem:[#allocation10 + $0x238] sm:$0xff]
        %v861 = vld [vmem:[#allocation10 + $0x240] sm:$0xff]
        %v862 = vld [vmem:[#allocation10 + $0x248] sm:$0xff]
        %v863 = vld [vmem:[#allocation10 + $0x250] sm:$0xff]
        %v864 = vld [vmem:[#allocation10 + $0x258] sm:$0xff]
        %v865 = vld [vmem:[#allocation10 + $0x260] sm:$0xff]
        %v866 = vld [vmem:[#allocation10 + $0x268] sm:$0xff]
        %v867 = vld [vmem:[#allocation10 + $0x270] sm:$0xff]
        %v868 = vld [vmem:[#allocation10 + $0x278] sm:$0xff]
        %v869 = vld [vmem:[#allocation10 + $0x280] sm:$0xff]
        %v870 = vld [vmem:[#allocation10 + $0x288] sm:$0xff]
        %v871 = vld [vmem:[#allocation10 + $0x290] sm:$0xff]
        %v872 = vld [vmem:[#allocation10 + $0x298] sm:$0xff]
        %v873 = vld [vmem:[#allocation10 + $0x2a0] sm:$0xff]
        %v874 = vld [vmem:[#allocation10 + $0x2a8] sm:$0xff]
        %v875 = vld [vmem:[#allocation10 + $0x2b0] sm:$0xff]
        %v876 = vld [vmem:[#allocation10 + $0x2b8] sm:$0xff]
        %v877 = vld [vmem:[#allocation10 + $0x2c0] sm:$0xff]
        %v878 = vld [vmem:[#allocation10 + $0x2c8] sm:$0xff]
        %v879 = vld [vmem:[#allocation10 + $0x2d0] sm:$0xff]
        %v880 = vld [vmem:[#allocation10 + $0x2d8] sm:$0xff]
        %v881 = vld [vmem:[#allocation10 + $0x2e0] sm:$0xff]
        %v882 = vld [vmem:[#allocation10 + $0x2e8] sm:$0xff]
        %v883 = vld [vmem:[#allocation10 + $0x2f0] sm:$0xff]
        %v884 = vld [vmem:[#allocation10 + $0x2f8] sm:$0xff]
        %v885 = vld [vmem:[#allocation12] sm:$0xff]
        %v886 = vld [vmem:[#allocation12 + $0x8] sm:$0xff]
        %v887 = vld [vmem:[#allocation12 + $0x10] sm:$0xff]
        %v888 = vld [vmem:[#allocation12 + $0x18] sm:$0xff]
        %v889 = vld [vmem:[#allocation12 + $0x20] sm:$0xff]
        %v890 = vld [vmem:[#allocation12 + $0x28] sm:$0xff]
        %v891 = vld [vmem:[#allocation12 + $0x30] sm:$0xff]
        %v892 = vld [vmem:[#allocation12 + $0x38] sm:$0xff]
        %v893 = vld [vmem:[#allocation12 + $0x40] sm:$0xff]
        %v894 = vld [vmem:[#allocation12 + $0x48] sm:$0xff]
        %v895 = vld [vmem:[#allocation12 + $0x50] sm:$0xff]
        %v896 = vld [vmem:[#allocation12 + $0x58] sm:$0xff]
        %v897 = vld [vmem:[#allocation12 + $0x60] sm:$0xff]
        %v898 = vld [vmem:[#allocation12 + $0x68] sm:$0xff]
        %v899 = vld [vmem:[#allocation12 + $0x70] sm:$0xff]
        %v900 = vld [vmem:[#allocation12 + $0x78] sm:$0xff]
        %v901 = vld [vmem:[%s7] sm:$0x7]
        %v902 = vld [vmem:[%s8] sm:$0x1]
        %v904 = vlaneseq
        %v905 = vshrl.u32 %v904, 7
        %v906 = vsub.s32 0, %v905
        %v907 = vrot.slane %v901, %v906
        %v908 = vlaneseq
        %v909 = vshrl.u32 %v908, 7
        %v910 = vsub.s32 1, %v909
        %v911 = vrot.slane %v901, %v910
        %v912 = vlaneseq
        %v913 = vshrl.u32 %v912, 7
        %v914 = vsub.s32 2, %v913
        %v915 = vrot.slane %v901, %v914
        %919 = vmatprep.subr.mxu0 %v790
        %920 = vmatpush1.msra.mxu0 %v789
        %921 = vmatprep.subr.mxu0 %v793
        %922 = vmatpush1.msra.mxu0 %v792
        %923 = vmatprep.subr.mxu0 %v796
        %924 = vmatpush1.msra.mxu0 %v795
        %925 = vmatprep.subr.mxu0 %v799
        %926 = vmatpush1.msra.mxu0 %v798
        %927 = vmatprep.subr.mxu0 %v802
        %928 = vmatpush1.msra.mxu0 %v801
        %929 = vmatprep.subr.mxu0 %v805
        %930 = vmatpush1.msra.mxu0 %v804
        %931 = vmatprep.subr.mxu0 %v808
        %932 = vmatpush1.msra.mxu0 %v807
        %933 = vmatprep.subr.mxu0 %v811
        %934 = vmatpush1.msra.mxu0 %v810
        %935 = vmatprep.subr.mxu0 %v814
        %936 = vmatpush1.msra.mxu0 %v813
        %937 = vmatprep.subr.mxu0 %v817
        %938 = vmatpush1.msra.mxu0 %v816
        %939 = vmatprep.subr.mxu0 %v820
        %940 = vmatpush1.msra.mxu0 %v819
        %941 = vmatprep.subr.mxu0 %v823
        %942 = vmatpush1.msra.mxu0 %v822
        %943 = vmatprep.subr.mxu0 %v826
        %944 = vmatpush1.msra.mxu0 %v825
        %945 = vmatprep.subr.mxu0 %v829
        %946 = vmatpush1.msra.mxu0 %v828
        %947 = vmatprep.subr.mxu0 %v832
        %948 = vmatpush1.msra.mxu0 %v831
        %949 = vmatprep.subr.mxu0 %v835
        %950 = vmatpush1.msra.mxu0 %v834
        %951 = vmatprep.subr.mxu0 %v838
        %952 = vmatpush1.msra.mxu0 %v837
        %953 = vmatprep.subr.mxu0 %v841
        %954 = vmatpush1.msra.mxu0 %v840
        %955 = vmatprep.subr.mxu0 %v844
        %956 = vmatpush1.msra.mxu0 %v843
        %957 = vmatprep.subr.mxu0 %v847
        %958 = vmatpush1.msra.mxu0 %v846
        %959 = vmatprep.subr.mxu0 %v850
        %960 = vmatpush1.msra.mxu0 %v849
        %961 = vmatprep.subr.mxu0 %v853
        %962 = vmatpush1.msra.mxu0 %v852
        %963 = vmatprep.subr.mxu0 %v856
        %964 = vmatpush1.msra.mxu0 %v855
        %965 = vmatprep.subr.mxu0 %v859
        %966 = vmatpush1.msra.mxu0 %v858
        %967 = vmatprep.subr.mxu0 %v862
        %968 = vmatpush1.msra.mxu0 %v861
        %969 = vmatprep.subr.mxu0 %v865
        %970 = vmatpush1.msra.mxu0 %v864
        %971 = vmatprep.subr.mxu0 %v868
        %972 = vmatpush1.msra.mxu0 %v867
        %973 = vmatprep.subr.mxu0 %v871
        %974 = vmatpush1.msra.mxu0 %v870
        %975 = vmatprep.subr.mxu0 %v874
        %976 = vmatpush1.msra.mxu0 %v873
        %977 = vmatprep.subr.mxu0 %v877
        %978 = vmatpush1.msra.mxu0 %v876
        %979 = vmatprep.subr.mxu0 %v880
        %980 = vmatpush1.msra.mxu0 %v879
        %981 = vmatprep.subr.mxu0 %v883
        %982 = vmatpush1.msra.mxu0 %v882
        %983 = vmatprep.mubr.f32.mxu0 %v788
        %984 = vmatmul.mubr.f32.gmra.mrb[0].mxu0 %v787
        %v985 = vpop.f32.mrb[0].mxu0
        %v986 = vadd.f32 %v907, %v985
        %v987 = vpop.f32.mrb[0].mxu0
        %v988 = vadd.f32 %v911, %v987
        %989 = vdwg.mxu0
        %990 = vmatprep.subr.mxu0 0.0
        %991 = vmatpush1.msra.mxu0 %v791
        %992 = vmatprep.subr.mxu0 0.0
        %993 = vmatpush1.msra.mxu0 %v794
        %994 = vmatprep.subr.mxu0 0.0
        %995 = vmatpush1.msra.mxu0 %v797
        %996 = vmatprep.subr.mxu0 0.0
        %997 = vmatpush1.msra.mxu0 %v800
        %998 = vmatprep.subr.mxu0 0.0
        %999 = vmatpush1.msra.mxu0 %v803
        %1000 = vmatprep.subr.mxu0 0.0
        %1001 = vmatpush1.msra.mxu0 %v806
        %1002 = vmatprep.subr.mxu0 0.0
        %1003 = vmatpush1.msra.mxu0 %v809
        %1004 = vmatprep.subr.mxu0 0.0
        %1005 = vmatpush1.msra.mxu0 %v812
        %1006 = vmatprep.subr.mxu0 0.0
        %1007 = vmatpush1.msra.mxu0 %v815
        %1008 = vmatprep.subr.mxu0 0.0
        %1009 = vmatpush1.msra.mxu0 %v818
        %1010 = vmatprep.subr.mxu0 0.0
        %1011 = vmatpush1.msra.mxu0 %v821
        %1012 = vmatprep.subr.mxu0 0.0
        %1013 = vmatpush1.msra.mxu0 %v824
        %1014 = vmatprep.subr.mxu0 0.0
        %1015 = vmatpush1.msra.mxu0 %v827
        %1016 = vmatprep.subr.mxu0 0.0
        %1017 = vmatpush1.msra.mxu0 %v830
        %1018 = vmatprep.subr.mxu0 0.0
        %1019 = vmatpush1.msra.mxu0 %v833
        %1020 = vmatprep.subr.mxu0 0.0
        %1021 = vmatpush1.msra.mxu0 %v836
        %1022 = vmatprep.subr.mxu0 0.0
        %1023 = vmatpush1.msra.mxu0 %v839
        %1024 = vmatprep.subr.mxu0 0.0
        %1025 = vmatpush1.msra.mxu0 %v842
        %1026 = vmatprep.subr.mxu0 0.0
        %1027 = vmatpush1.msra.mxu0 %v845
        %1028 = vmatprep.subr.mxu0 0.0
        %1029 = vmatpush1.msra.mxu0 %v848
        %1030 = vmatprep.subr.mxu0 0.0
        %1031 = vmatpush1.msra.mxu0 %v851
        %1032 = vmatprep.subr.mxu0 0.0
        %1033 = vmatpush1.msra.mxu0 %v854
        %1034 = vmatprep.subr.mxu0 0.0
        %1035 = vmatpush1.msra.mxu0 %v857
        %1036 = vmatprep.subr.mxu0 0.0
        %1037 = vmatpush1.msra.mxu0 %v860
        %1038 = vmatprep.subr.mxu0 0.0
        %1039 = vmatpush1.msra.mxu0 %v863
        %1040 = vmatprep.subr.mxu0 0.0
        %1041 = vmatpush1.msra.mxu0 %v866
        %1042 = vmatprep.subr.mxu0 0.0
        %1043 = vmatpush1.msra.mxu0 %v869
        %1044 = vmatprep.subr.mxu0 0.0
        %1045 = vmatpush1.msra.mxu0 %v872
        %1046 = vmatprep.subr.mxu0 0.0
        %1047 = vmatpush1.msra.mxu0 %v875
        %1048 = vmatprep.subr.mxu0 0.0
        %1049 = vmatpush1.msra.mxu0 %v878
        %1050 = vmatprep.subr.mxu0 0.0
        %1051 = vmatpush1.msra.mxu0 %v881
        %1052 = vmatprep.subr.mxu0 0.0
        %1053 = vmatpush1.msra.mxu0 %v884
        %1054 = vmatprep.mubr.f32.mxu0 %v788
        %1055 = vmatmul.mubr.f32.gmra.mrb[0].mxu0 %v787
        %v1056 = vpop.f32.mrb[0].mxu0
        %v1057 = vadd.f32 %v915, %v1056
        %v1058 = vpop.f32.mrb[0].mxu0
        %1059 = vdwg.mxu0
        %v1060 = vxor.u32 %v986, 2147483648
        %v1061 = vxor.u32 %v988, 2147483648
        %v1062 = vmul.f32 %v1060, 1.442695
        %v1063 = vpow.pop %v1062
        %v1064 = vmul.f32 %v1061, 1.442695
        %v1065 = vpow.pop %v1064
        %v1066 = vadd.f32 %v1063, 1.0
        %v1067 = vadd.f32 %v1065, 1.0
        %v1068 = vrcp.pop %v1066
        %v1069 = vmul.f32 1.0, %v1068
        %v1070 = vrcp.pop %v1067
        %v1071 = vmul.f32 1.0, %v1070
        %v1073 = vlaneseq
        %v1074 = vshrl.u32 %v1073, 7
        %v1075 = vsub.s32 0, %v1074
        %v1076 = vrot.slane %v902, %v1075
        %1078 = vmatprep.subr.mxu0 0.0
        %1079 = vmatpush1.msra.mxu0 %v885
        %1080 = vmatprep.subr.mxu0 0.0
        %1081 = vmatpush1.msra.mxu0 %v886
        %1082 = vmatprep.subr.mxu0 0.0
        %1083 = vmatpush1.msra.mxu0 %v887
        %1084 = vmatprep.subr.mxu0 0.0
        %1085 = vmatpush1.msra.mxu0 %v888
        %1086 = vmatprep.subr.mxu0 0.0
        %1087 = vmatpush1.msra.mxu0 %v889
        %1088 = vmatprep.subr.mxu0 0.0
        %1089 = vmatpush1.msra.mxu0 %v890
        %1090 = vmatprep.subr.mxu0 0.0
        %1091 = vmatpush1.msra.mxu0 %v891
        %1092 = vmatprep.subr.mxu0 0.0
        %1093 = vmatpush1.msra.mxu0 %v892
        %1094 = vmatprep.subr.mxu0 0.0
        %1095 = vmatpush1.msra.mxu0 %v893
        %1096 = vmatprep.subr.mxu0 0.0
        %1097 = vmatpush1.msra.mxu0 %v894
        %1098 = vmatprep.subr.mxu0 0.0
        %1099 = vmatpush1.msra.mxu0 %v895
        %1100 = vmatprep.subr.mxu0 0.0
        %1101 = vmatpush1.msra.mxu0 %v896
        %1102 = vmatprep.subr.mxu0 0.0
        %1103 = vmatpush1.msra.mxu0 %v897
        %1104 = vmatprep.subr.mxu0 0.0
        %1105 = vmatpush1.msra.mxu0 %v898
        %1106 = vmatprep.subr.mxu0 0.0
        %1107 = vmatpush1.msra.mxu0 %v899
        %1108 = vmatprep.subr.mxu0 0.0
        %1109 = vmatpush1.msra.mxu0 %v900
        %1110 = vmatprep.subr.mxu0 0.0
        %1111 = vmatpush1.msra.mxu0 0.0
        %1112 = vmatprep.subr.mxu0 0.0
        %1113 = vmatpush1.msra.mxu0 0.0
        %1114 = vmatprep.subr.mxu0 0.0
        %1115 = vmatpush1.msra.mxu0 0.0
        %1116 = vmatprep.subr.mxu0 0.0
        %1117 = vmatpush1.msra.mxu0 0.0
        %1118 = vmatprep.subr.mxu0 0.0
        %1119 = vmatpush1.msra.mxu0 0.0
        %1120 = vmatprep.subr.mxu0 0.0
        %1121 = vmatpush1.msra.mxu0 0.0
        %1122 = vmatprep.subr.mxu0 0.0
        %1123 = vmatpush1.msra.mxu0 0.0
        %1124 = vmatprep.subr.mxu0 0.0
        %1125 = vmatpush1.msra.mxu0 0.0
        %1126 = vmatprep.subr.mxu0 0.0
        %1127 = vmatpush1.msra.mxu0 0.0
        %1128 = vmatprep.subr.mxu0 0.0
        %1129 = vmatpush1.msra.mxu0 0.0
        %1130 = vmatprep.subr.mxu0 0.0
        %1131 = vmatpush1.msra.mxu0 0.0
        %1132 = vmatprep.subr.mxu0 0.0
        %1133 = vmatpush1.msra.mxu0 0.0
        %1134 = vmatprep.subr.mxu0 0.0
        %1135 = vmatpush1.msra.mxu0 0.0
        %1136 = vmatprep.subr.mxu0 0.0
        %1137 = vmatpush1.msra.mxu0 0.0
        %1138 = vmatprep.subr.mxu0 0.0
        %1139 = vmatpush1.msra.mxu0 0.0
        %1140 = vmatprep.subr.mxu0 0.0
        %1141 = vmatpush1.msra.mxu0 0.0
        %1142 = vmatprep.mubr.f32.mxu0 0.0
        %1143 = vmatmul.mubr.f32.gmra.mrb[0].mxu0 %v788
        %v1144 = vpop.f32.mrb[0].mxu0
        %v1145 = vadd.f32 %v1076, %v1144
        %v1146 = vpop.f32.mrb[0].mxu0
        %1147 = vdwg.mxu0
        %v1148 = vmul.f32 %v1069, %v1145
        %v1149 = vadd.f32 %v1057, %v1148
        %v1150 = vtanh.pop %v1149
        %v1151 = vsub.f32 1.0, %v1071
        %v1152 = vmul.f32 %v1151, %v1150
        %v1153 = vmul.f32 %v1071, %v788
        %v1154 = vadd.f32 %v1152, %v1153
        %1155 = vst [vmem:[#allocation2] sm:$0xff] %v787
        %1156 = vst [vmem:[#allocation3] sm:$0xff] %v1154
        %p1157 = scmp.eq.s32.totalorder %s31, 7
        // Predicated region
        $region81: #{tpu_custom_call.1} parent=55 // pred_check
          %p1158 = pneg %p1157
        $region82: #{tpu_custom_call.1} parent=55 // pred_check_branch
          %1160 = sbr.rel (%p1158) target = $region84
        $region83: #{tpu_custom_call.1} parent=55 // pred_region
          %v1161 = vlaneseq
          %v1162 = vand.u32 %v1161, 127
          %vm1163 = vcmp.lt.s32.totalorder %v1162, 32
          %v1164 = vsel %vm1163, %v1154, -inf
          %1165 = vmax.xlane.f32.xlu0 %v1164
          %v1166 = vpop.xlane.xlu0 %1165
          %v1167 = vsub.f32 %v1164, %v1166
          %v1168 = vmul.f32 %v1167, 1.442695
          %v1169 = vpow.pop %v1168
          %1170 = vadd.xlane.f32.xlu0 %v1169
          %v1171 = vpop.xlane.xlu0 %1170
          %v1172 = vlog2.pop %v1171
          %v1173 = vmul.f32 %v1172, 0.6931472
          %v1174 = vsub.f32 %v1167, %v1173
          %1175 = vst [vmem:[#allocation13] sm:$0xff] %v1174
        $region84: #{tpu_custom_call.1} parent=55 // pred_fallthru
          _
        // Predicated region
        $region85: #{tpu_custom_call.1} parent=55 // pred_check
          %p1176 = pneg %p252
        $region86: #{tpu_custom_call.1} parent=55 // pred_check_branch
          %1178 = sbr.rel (%p1176) target = $region88
        $region87: #{tpu_custom_call.1} parent=55 // pred_region
          %s1180 = ssub.s32 128, 128
          %1181 = vsyncadd [#allocation6], %s1180
          %s1182 = smul.addr %s30, 128
          %s1183 = scalar_lea.hbm %s9, %s1182
          %s1185 = sshll.u32 [#allocation13], 4
          %s1186 = int_to_ptr.vmem [resolvable:$true] %s1185
          %1188 = dma.vmem_to_hbm [thread:$0]  %s1186, 128, %s1183, [#allocation6]
        $region88: #{tpu_custom_call.1} parent=55 // pred_fallthru
          _
        // Predicated region
        $region89: #{tpu_custom_call.1} parent=55 // pred_check
          %p1189 = pneg %p252
        $region90: #{tpu_custom_call.1} parent=55 // pred_check_branch
          %1191 = sbr.rel (%p1189) target = $region92
        $region91: #{tpu_custom_call.1} parent=55 // pred_region
          %1192 = dma.done [#allocation6], 128
        $region92: #{tpu_custom_call.1} parent=55 // pred_fallthru
          _
      $region56: #{tpu_custom_call.1} parent=5 // pred_fallthru
        _
      %p1193 = scmp.le.s32.totalorder 2, %s21
      // Predicated region
      $region93: #{tpu_custom_call.1} parent=5 // pred_check
        %p1194 = pneg %p1193
      $region94: #{tpu_custom_call.1} parent=5 // pred_check_branch
        %1196 = sbr.rel (%p1194) target = $region96
      $region95: #{tpu_custom_call.1} parent=5 // pred_region
        %s1197 = ssub.s32 %s21, 2
      $region96: #{tpu_custom_call.1} parent=5 // pred_fallthru
        _
    $region6: #{tpu_custom_call.1} parent=1 // loop_footer
      %s25 = sadd.s32 1, %s21
    $region7: #{tpu_custom_call.1} parent=1 // loop_footer_branch
      %20 = sbr.rel target = $region3
    $region8: #{tpu_custom_call.1} parent=1 // loop_exit
      _
    %1198 = vsyncpa [#allocation5], 1
    %s1199 = scalar_lea.sflag [#allocation5], 1
    %1200 = vsyncpa %s1199, 1
    %1201 = vsyncpa [#allocation8], 1
    %1202 = vsyncpa [#allocation11], 1
    %1203 = vsyncpa [#allocation6], 1
    %s1204 = scalar_lea.sflag [#allocation6], 1
    %1205 = vsyncpa %s1204, 1

</llo_original>
